<compile_context>
chip_gen: v7x
topology: tpu7x:2x2x1
jax: 0.10.0
libtpu: 0.0.40
codegen_flags: <defaults>
</compile_context>

<pallas_src>
import functools
import math

import jax
import jax.numpy as jnp
import numpy as np
from jax import lax
from jax.experimental import pallas as pl
from jax.experimental.pallas import tpu as pltpu


def _layer_norm_f32(x, gamma, beta, eps=1e-5):
    # PyTorch LayerNorm: biased variance over the last dim, eps inside rsqrt.
    mu = jnp.mean(x, axis=-1, keepdims=True)
    var = jnp.mean((x - mu) ** 2, axis=-1, keepdims=True)
    return (x - mu) * lax.rsqrt(var + eps) * gamma + beta


def decoder_block_kernel(
    x_ref, kv_ref,
    wq_ref, wk_ref, wv_ref, wo_t_ref,
    w1_ref, b1_ref, w2_ref, b2_ref,
    gm_ref, bm_ref, ga_ref, ba_ref, gf_ref, bf_ref,
    out_ref,
    kproj_sc, vproj_sc,
    *, n_splits,
):
    qi = pl.program_id(1)

    # LayerNorm params, read once per grid step (f32, shape (H,)).
    gm, bm = gm_ref[0], bm_ref[0]
    ga, ba = ga_ref[0], ba_ref[0]
    gf, bf = gf_ref[0], bf_ref[0]

    H = out_ref.shape[-1]
    dk = H // n_splits
    scale = 1.0 / math.sqrt(dk)
    nt = (((1,), (1,)), ((), ()))   # contract the last dim of both operands (A @ B.T)

    # ---- K/V path: depends only on the batch row -> compute once per row (qi == 0)
    # into bf16 VMEM scratch; the qi axis is "arbitrary" so it runs in order.
    @pl.when(qi == 0)
    def _():
        kv = kv_ref[0].astype(jnp.float32)                              # (Skv, H)
        kvn = _layer_norm_f32(kv, ga, ba).astype(jnp.bfloat16)          # attn_norm(kv)
        kproj_sc[...] = jnp.dot(
            kvn, wk_ref[...], preferred_element_type=jnp.float32
        ).astype(jnp.bfloat16)
        vproj_sc[...] = jnp.dot(
            kvn, wv_ref[...], preferred_element_type=jnp.float32
        ).astype(jnp.bfloat16)

    # ---- Q path for this (batch, query-tile) block.
    x = x_ref[0].astype(jnp.float32)                                    # (tq, H)
    z0 = _layer_norm_f32(x, gm, bm)            # masked_attn_norm(x)
    qn = _layer_norm_f32(z0, ga, ba)           # attn_norm(z0)

    q_proj = jnp.dot(qn.astype(jnp.bfloat16), wq_ref[...],
                     preferred_element_type=jnp.float32)                # (tq, H)
    # Fold 1/sqrt(dk) into Q once.
    q_b = (q_proj * scale).astype(jnp.bfloat16)

    # ---- Per-head attention with the output projection folded into the loop:
    #        attn_out = sum_h softmax(q_h k_h^T) v_h @ Wo[h*dk:(h+1)*dk, :]
    # No lane-axis concat, no explicit transposes.
    attn_out = jnp.zeros((x.shape[0], H), jnp.float32)
    for h in range(n_splits):
        lo = h * dk
        qh = q_b[:, lo:lo + dk]                                         # (tq, dk)  bf16
        kh = kproj_sc[:, lo:lo + dk]                                    # (Skv, dk) bf16
        vh = vproj_sc[:, lo:lo + dk]                                    # (Skv, dk) bf16
        s = lax.dot_general(qh, kh, nt,
                            preferred_element_type=jnp.float32)         # (tq, Skv) f32
        s = s - jnp.max(s, axis=-1, keepdims=True)
        e = jnp.exp(s)
        p = e * pl.reciprocal(jnp.sum(e, axis=-1, keepdims=True), approx=True)
        ctx = jnp.dot(p.astype(jnp.bfloat16), vh,
                      preferred_element_type=jnp.float32)               # (tq, dk) f32
        # Wo is stored (out, in) so the per-head slice is a lane-axis slice.
        attn_out = attn_out + lax.dot_general(
            ctx.astype(jnp.bfloat16), wo_t_ref[:, lo:lo + dk], nt,
            preferred_element_type=jnp.float32)                         # (tq, H) f32

    z1 = z0 + attn_out                          # attn_dropout == identity (eval)

    # ---- feed-forward: Linear(H,4H) -> ReLU -> Linear(4H,H); fc_dropout identity.
    zf = _layer_norm_f32(z1, gf, bf).astype(jnp.bfloat16)
    h1 = jnp.dot(zf, w1_ref[...], preferred_element_type=jnp.float32) + b1_ref[0]
    h1 = jnp.maximum(h1, 0.0).astype(jnp.bfloat16)
    ff = jnp.dot(h1, w2_ref[...], preferred_element_type=jnp.float32) + b2_ref[0]

    out_ref[0] = (z1 + ff).astype(out_ref.dtype)


def _pick_q_tile(seq_len, target):
    """Largest tile <= target that evenly divides seq_len (keeps BlockSpecs exact)."""
    if seq_len <= target:
        return seq_len
    for t in range(target, 0, -1):
        if seq_len % t == 0:
            return t
    return seq_len


def decoder_block_pallas(x, key_and_value, params, n_splits, *, q_tile=256):
    B, S, H = x.shape
    Skv = key_and_value.shape[1]
    tq = _pick_q_tile(S, q_tile)
    n_qt = S // tq

    bf16 = jnp.bfloat16
    # Matmul weights live as bf16.  x @ W layout (in, out) everywhere except the
    # attention output projection, which is kept in PyTorch (out, in) layout so the
    # per-head slice inside the kernel lands on the lane axis.
    wq = params["wq"].astype(bf16)
    wk = params["wk"].astype(bf16)
    wv = params["wv"].astype(bf16)
    wo_t = params["wo"].T.astype(bf16)
    w1 = params["w1"].astype(bf16)
    w2 = params["w2"].astype(bf16)

    def const_spec(shape):                       # weights / biases: same block every step
        return pl.BlockSpec(shape, lambda b, q: (0, 0))

    in_specs = [
        pl.BlockSpec((1, tq, H), lambda b, q: (b, q, 0)),     # x (query tile)
        pl.BlockSpec((1, Skv, H), lambda b, q: (b, 0, 0)),    # key_and_value (full seq)
        const_spec((H, H)),          # wq
        const_spec((H, H)),          # wk
        const_spec((H, H)),          # wv
        const_spec((H, H)),          # wo (transposed: (out, in))
        const_spec((H, 4 * H)),      # w1
        const_spec((1, 4 * H)),      # b1 (f32)
        const_spec((4 * H, H)),      # w2
        const_spec((1, H)),          # b2 (f32)
        const_spec((1, H)), const_spec((1, H)),   # masked_attn_norm gamma / beta
        const_spec((1, H)), const_spec((1, H)),   # attn_norm gamma / beta
        const_spec((1, H)), const_spec((1, H)),   # fc_norm gamma / beta
    ]
    out_specs = pl.BlockSpec((1, tq, H), lambda b, q: (b, q, 0))

    kernel = functools.partial(decoder_block_kernel, n_splits=n_splits)

    z = pl.pallas_call(
        kernel,
        out_shape=jax.ShapeDtypeStruct((B, S, H), x.dtype),
        grid=(B, n_qt),
        in_specs=in_specs,
        out_specs=out_specs,
        scratch_shapes=[
            pltpu.VMEM((Skv, H), bf16),   # K projection, reused across query tiles
            pltpu.VMEM((Skv, H), bf16),   # V projection, reused across query tiles
        ],
        compiler_params=pltpu.CompilerParams(
            # Batch axis shards across TensorCores; the query-tile axis carries the
            # K/V-scratch reuse so it must stay sequential ("arbitrary").
            dimension_semantics=("parallel", "arbitrary"),
            vmem_limit_bytes=64 * 1024 * 1024,
        ),
    )(
        x, key_and_value,
        wq, wk, wv, wo_t, w1, params["b1"], w2, params["b2"],
        params["gm"], params["bm"], params["ga"], params["ba"],
        params["gf"], params["bf"],
    )
    # forward returns (z, key_and_value)
    return z, key_and_value


# ---------------- pure-JAX f32 reference (matches the PyTorch module) ----------------
def decoder_block_ref(x, kv, p, n_splits):
    def ln(v, g, b):
        mu = v.mean(-1, keepdims=True)
        var = ((v - mu) ** 2).mean(-1, keepdims=True)
        return (v - mu) / jnp.sqrt(var + 1e-5) * g[0] + b[0]

    H = x.shape[-1]
    dk = H // n_splits
    z0 = ln(x, p["gm"], p["bm"])
    kvn = ln(kv, p["ga"], p["ba"])
    qn = ln(z0, p["ga"], p["ba"])
    qp = qn @ p["wq"]
    kp = kvn @ p["wk"]
    vp = kvn @ p["wv"]

    def heads(t):   # split last dim into heads, stack along leading batch (torch.cat dim=0)
        return jnp.concatenate(jnp.split(t, n_splits, axis=-1), axis=0)

    qh, kh, vh = heads(qp), heads(kp), heads(vp)
    s = jnp.einsum("bqd,bkd->bqk", qh, kh) / math.sqrt(dk)
    w = jax.nn.softmax(s, axis=-1)
    c = jnp.einsum("bqk,bkd->bqd", w, vh)
    c = jnp.concatenate(jnp.split(c, n_splits, axis=0), axis=-1)
    attn_out = c @ p["wo"]
    z1 = z0 + attn_out
    zf = ln(z1, p["gf"], p["bf"])
    ff = jnp.maximum(zf @ p["w1"] + p["b1"][0], 0.0) @ p["w2"] + p["b2"][0]
    return z1 + ff, kv


if __name__ == "__main__":
    def make_params(key, H):
        ks = jax.random.split(key, 8)
        ws = 1.0 / math.sqrt(H)
        return {
            "wq": ws * jax.random.normal(ks[0], (H, H), jnp.float32),
            "wk": ws * jax.random.normal(ks[1], (H, H), jnp.float32),
            "wv": ws * jax.random.normal(ks[2], (H, H), jnp.float32),
            "wo": ws * jax.random.normal(ks[3], (H, H), jnp.float32),
            "w1": ws * jax.random.normal(ks[4], (H, 4 * H), jnp.float32),
            "b1": 0.1 * jax.random.normal(ks[5], (1, 4 * H), jnp.float32),
            "w2": (1.0 / math.sqrt(4 * H)) * jax.random.normal(ks[6], (4 * H, H), jnp.float32),
            "b2": 0.1 * jax.random.normal(ks[7], (1, H), jnp.float32),
            # LayerNorm params: PyTorch default init (gamma=1, beta=0)
            "gm": jnp.ones((1, H), jnp.float32), "bm": jnp.zeros((1, H), jnp.float32),
            "ga": jnp.ones((1, H), jnp.float32), "ba": jnp.zeros((1, H), jnp.float32),
            "gf": jnp.ones((1, H), jnp.float32), "bf": jnp.zeros((1, H), jnp.float32),
        }

    root = jax.random.PRNGKey(0)
    k_t1, k_t2 = jax.random.split(root)

    # ---- test 1: B=2, S=Skv=8, H=32, n_splits=4 (single query tile) ----
    B, S, H, n_splits = 2, 8, 32, 4
    kx, kkv, kp = jax.random.split(k_t1, 3)
    x = jax.random.normal(kx, (B, S, H), jnp.float32)
    kv = jax.random.normal(kkv, (B, S, H), jnp.float32)
    params = make_params(kp, H)

    z, kv_out = decoder_block_pallas(x, kv, params, n_splits)
    jax.block_until_ready(z)
    z_ref, _ = decoder_block_ref(x, kv, params, n_splits)
    # bf16 matmul inputs + approx reciprocal -> relaxed tolerance vs the f32 reference.
    np.testing.assert_allclose(np.asarray(z), np.asarray(z_ref), rtol=2e-2, atol=5e-2)
    np.testing.assert_allclose(np.asarray(kv_out), np.asarray(kv))

    # ---- test 2: multiple query tiles (exercises the K/V scratch reuse across the
    #              "arbitrary" q-tile axis) and cross-attention length Skv != S ----
    B, S, Skv, H, n_splits = 2, 16, 24, 32, 4
    kx, kkv, kp = jax.random.split(k_t2, 3)
    x = jax.random.normal(kx, (B, S, H), jnp.float32)
    kv = jax.random.normal(kkv, (B, Skv, H), jnp.float32)
    params = make_params(kp, H)

    z, kv_out = decoder_block_pallas(x, kv, params, n_splits, q_tile=8)  # -> 2 query tiles
    jax.block_until_ready(z)
    z_ref, _ = decoder_block_ref(x, kv, params, n_splits)
    np.testing.assert_allclose(np.asarray(z), np.asarray(z_ref), rtol=2e-2, atol=5e-2)
    np.testing.assert_allclose(np.asarray(kv_out), np.asarray(kv))

    print("KERNEL_OK")
</pallas_src>

<mosaic_0001>
module attributes {stable_mosaic.version = 11 : i64} {
  func.func @decoder_block_kernel(%arg0: i32, %arg1: i32, %arg2: memref<1x8x32xf32, #tpu.memory_space<vmem>>, %arg3: memref<1x8x32xf32, #tpu.memory_space<vmem>>, %arg4: memref<32x32xbf16, #tpu.memory_space<vmem>>, %arg5: memref<32x32xbf16, #tpu.memory_space<vmem>>, %arg6: memref<32x32xbf16, #tpu.memory_space<vmem>>, %arg7: memref<32x32xbf16, #tpu.memory_space<vmem>>, %arg8: memref<32x128xbf16, #tpu.memory_space<vmem>>, %arg9: memref<1x128xf32, #tpu.memory_space<vmem>>, %arg10: memref<128x32xbf16, #tpu.memory_space<vmem>>, %arg11: memref<1x32xf32, #tpu.memory_space<vmem>>, %arg12: memref<1x32xf32, #tpu.memory_space<vmem>>, %arg13: memref<1x32xf32, #tpu.memory_space<vmem>>, %arg14: memref<1x32xf32, #tpu.memory_space<vmem>>, %arg15: memref<1x32xf32, #tpu.memory_space<vmem>>, %arg16: memref<1x32xf32, #tpu.memory_space<vmem>>, %arg17: memref<1x32xf32, #tpu.memory_space<vmem>>, %arg18: memref<1x8x32xf32, #tpu.memory_space<vmem>>, %arg19: memref<8x32xbf16, #tpu.memory_space<vmem>>, %arg20: memref<8x32xbf16, #tpu.memory_space<vmem>>) attributes {dimension_semantics = [#tpu.dimension_semantics<parallel>, #tpu.dimension_semantics<arbitrary>], iteration_bounds = array<i64: 2, 1>, scalar_prefetch = 0 : i64, scratch_operands = 2 : i64, tpu.core_type = #tpu.core_type<tc>, window_params = [{transform_indices = @transform_0, window_bounds = array<i64: 1, 8, 32>}, {transform_indices = @transform_1, window_bounds = array<i64: 1, 8, 32>}, {pipeline_mode = #tpu.pipeline_mode<synchronous>, transform_indices = @transform_2, window_bounds = array<i64: 32, 32>}, {pipeline_mode = #tpu.pipeline_mode<synchronous>, transform_indices = @transform_3, window_bounds = array<i64: 32, 32>}, {pipeline_mode = #tpu.pipeline_mode<synchronous>, transform_indices = @transform_4, window_bounds = array<i64: 32, 32>}, {pipeline_mode = #tpu.pipeline_mode<synchronous>, transform_indices = @transform_5, window_bounds = array<i64: 32, 32>}, {pipeline_mode = #tpu.pipeline_mode<synchronous>, transform_indices = @transform_6, window_bounds = array<i64: 32, 128>}, {pipeline_mode = #tpu.pipeline_mode<synchronous>, transform_indices = @transform_7, window_bounds = array<i64: 1, 128>}, {pipeline_mode = #tpu.pipeline_mode<synchronous>, transform_indices = @transform_8, window_bounds = array<i64: 128, 32>}, {pipeline_mode = #tpu.pipeline_mode<synchronous>, transform_indices = @transform_9, window_bounds = array<i64: 1, 32>}, {pipeline_mode = #tpu.pipeline_mode<synchronous>, transform_indices = @transform_10, window_bounds = array<i64: 1, 32>}, {pipeline_mode = #tpu.pipeline_mode<synchronous>, transform_indices = @transform_11, window_bounds = array<i64: 1, 32>}, {pipeline_mode = #tpu.pipeline_mode<synchronous>, transform_indices = @transform_12, window_bounds = array<i64: 1, 32>}, {pipeline_mode = #tpu.pipeline_mode<synchronous>, transform_indices = @transform_13, window_bounds = array<i64: 1, 32>}, {pipeline_mode = #tpu.pipeline_mode<synchronous>, transform_indices = @transform_14, window_bounds = array<i64: 1, 32>}, {pipeline_mode = #tpu.pipeline_mode<synchronous>, transform_indices = @transform_15, window_bounds = array<i64: 1, 32>}, {transform_indices = @transform_16, window_bounds = array<i64: 1, 8, 32>}]} {
    %c0 = arith.constant 0 : index
    %c0_0 = arith.constant 0 : index
    %0 = vector.load %arg12[%c0, %c0_0] : memref<1x32xf32, #tpu.memory_space<vmem>>, vector<1x32xf32>
    %1 = vector.shape_cast %0 : vector<1x32xf32> to vector<32xf32>
    %c0_1 = arith.constant 0 : index
    %c0_2 = arith.constant 0 : index
    %2 = vector.load %arg13[%c0_1, %c0_2] : memref<1x32xf32, #tpu.memory_space<vmem>>, vector<1x32xf32>
    %3 = vector.shape_cast %2 : vector<1x32xf32> to vector<32xf32>
    %c0_3 = arith.constant 0 : index
    %c0_4 = arith.constant 0 : index
    %4 = vector.load %arg14[%c0_3, %c0_4] : memref<1x32xf32, #tpu.memory_space<vmem>>, vector<1x32xf32>
    %5 = vector.shape_cast %4 : vector<1x32xf32> to vector<32xf32>
    %c0_5 = arith.constant 0 : index
    %c0_6 = arith.constant 0 : index
    %6 = vector.load %arg15[%c0_5, %c0_6] : memref<1x32xf32, #tpu.memory_space<vmem>>, vector<1x32xf32>
    %7 = vector.shape_cast %6 : vector<1x32xf32> to vector<32xf32>
    %c0_7 = arith.constant 0 : index
    %c0_8 = arith.constant 0 : index
    %8 = vector.load %arg16[%c0_7, %c0_8] : memref<1x32xf32, #tpu.memory_space<vmem>>, vector<1x32xf32>
    %9 = vector.shape_cast %8 : vector<1x32xf32> to vector<32xf32>
    %c0_9 = arith.constant 0 : index
    %c0_10 = arith.constant 0 : index
    %10 = vector.load %arg17[%c0_9, %c0_10] : memref<1x32xf32, #tpu.memory_space<vmem>>, vector<1x32xf32>
    %11 = vector.shape_cast %10 : vector<1x32xf32> to vector<32xf32>
    %c0_i32 = arith.constant 0 : i32
    %12 = arith.cmpi eq, %arg1, %c0_i32 : i32
    %13 = arith.extui %12 : i1 to i32
    %c0_i32_11 = arith.constant 0 : i32
    %14 = arith.cmpi ne, %13, %c0_i32_11 : i32
    scf.if %14 {
      %c0_89 = arith.constant 0 : index
      %c0_90 = arith.constant 0 : index
      %c0_91 = arith.constant 0 : index
      %199 = vector.load %arg3[%c0_89, %c0_90, %c0_91] : memref<1x8x32xf32, #tpu.memory_space<vmem>>, vector<1x8x32xf32>
      %200 = vector.shape_cast %199 : vector<1x8x32xf32> to vector<8x32xf32>
      %cst_92 = arith.constant dense<0.000000e+00> : vector<8xf32>
      %201 = vector.multi_reduction <add>, %200, %cst_92 [1] : vector<8x32xf32> to vector<8xf32>
      %202 = vector.shape_cast %201 : vector<8xf32> to vector<8x1xf32>
      %cst_93 = arith.constant 3.200000e+01 : f32
      %203 = vector.broadcast %cst_93 : f32 to vector<8x1xf32>
      %204 = arith.divf %202, %203 : vector<8x1xf32>
      %205 = vector.broadcast %204 : vector<8x1xf32> to vector<8x32xf32>
      %206 = arith.subf %200, %205 : vector<8x32xf32>
      %207 = arith.mulf %206, %206 : vector<8x32xf32>
      %cst_94 = arith.constant dense<0.000000e+00> : vector<8xf32>
      %208 = vector.multi_reduction <add>, %207, %cst_94 [1] : vector<8x32xf32> to vector<8xf32>
      %209 = vector.shape_cast %208 : vector<8xf32> to vector<8x1xf32>
      %cst_95 = arith.constant 3.200000e+01 : f32
      %210 = vector.broadcast %cst_95 : f32 to vector<8x1xf32>
      %211 = arith.divf %209, %210 : vector<8x1xf32>
      %212 = vector.broadcast %204 : vector<8x1xf32> to vector<8x32xf32>
      %213 = arith.subf %200, %212 : vector<8x32xf32>
      %cst_96 = arith.constant 9.99999974E-6 : f32
      %214 = vector.broadcast %cst_96 : f32 to vector<8x1xf32>
      %215 = arith.addf %211, %214 : vector<8x1xf32>
      %216 = math.rsqrt %215 : vector<8x1xf32>
      %217 = vector.broadcast %216 : vector<8x1xf32> to vector<8x32xf32>
      %218 = arith.mulf %213, %217 : vector<8x32xf32>
      %219 = vector.shape_cast %5 : vector<32xf32> to vector<1x32xf32>
      %220 = vector.broadcast %219 : vector<1x32xf32> to vector<8x32xf32>
      %221 = arith.mulf %218, %220 : vector<8x32xf32>
      %222 = vector.shape_cast %7 : vector<32xf32> to vector<1x32xf32>
      %223 = vector.broadcast %222 : vector<1x32xf32> to vector<8x32xf32>
      %224 = arith.addf %221, %223 : vector<8x32xf32>
      %225 = arith.truncf %224 : vector<8x32xf32> to vector<8x32xbf16>
      %c0_97 = arith.constant 0 : index
      %c0_98 = arith.constant 0 : index
      %226 = vector.load %arg5[%c0_97, %c0_98] : memref<32x32xbf16, #tpu.memory_space<vmem>>, vector<32x32xbf16>
      %cst_99 = arith.constant dense<0.000000e+00> : vector<8x32xf32>
      %227 = tpu.matmul %225, %226, %cst_99 {dimension_numbers = #tpu.dot_dimension_numbers<[1], [0], [0], [1], [0, 0, 1, 1], [], []>} : vector<8x32xbf16>, vector<32x32xbf16>, vector<8x32xf32> -> vector<8x32xf32>
      %228 = arith.truncf %227 : vector<8x32xf32> to vector<8x32xbf16>
      %c0_100 = arith.constant 0 : index
      %c0_101 = arith.constant 0 : index
      %229 = vector.load %arg19[%c0_100, %c0_101] : memref<8x32xbf16, #tpu.memory_space<vmem>>, vector<8x32xbf16>
      tpu.vector_store %arg19[%c0_100, %c0_101], %228 {strides = array<i32>} : memref<8x32xbf16, #tpu.memory_space<vmem>>, vector<8x32xbf16>,
      %c0_102 = arith.constant 0 : index
      %c0_103 = arith.constant 0 : index
      %230 = vector.load %arg6[%c0_102, %c0_103] : memref<32x32xbf16, #tpu.memory_space<vmem>>, vector<32x32xbf16>
      %cst_104 = arith.constant dense<0.000000e+00> : vector<8x32xf32>
      %231 = tpu.matmul %225, %230, %cst_104 {dimension_numbers = #tpu.dot_dimension_numbers<[1], [0], [0], [1], [0, 0, 1, 1], [], []>} : vector<8x32xbf16>, vector<32x32xbf16>, vector<8x32xf32> -> vector<8x32xf32>
      %232 = arith.truncf %231 : vector<8x32xf32> to vector<8x32xbf16>
      %c0_105 = arith.constant 0 : index
      %c0_106 = arith.constant 0 : index
      %233 = vector.load %arg20[%c0_105, %c0_106] : memref<8x32xbf16, #tpu.memory_space<vmem>>, vector<8x32xbf16>
      tpu.vector_store %arg20[%c0_105, %c0_106], %232 {strides = array<i32>} : memref<8x32xbf16, #tpu.memory_space<vmem>>, vector<8x32xbf16>,
    } else {
    }
    %c0_12 = arith.constant 0 : index
    %c0_13 = arith.constant 0 : index
    %c0_14 = arith.constant 0 : index
    %15 = vector.load %arg2[%c0_12, %c0_13, %c0_14] : memref<1x8x32xf32, #tpu.memory_space<vmem>>, vector<1x8x32xf32>
    %16 = vector.shape_cast %15 : vector<1x8x32xf32> to vector<8x32xf32>
    %cst = arith.constant dense<0.000000e+00> : vector<8xf32>
    %17 = vector.multi_reduction <add>, %16, %cst [1] : vector<8x32xf32> to vector<8xf32>
    %18 = vector.shape_cast %17 : vector<8xf32> to vector<8x1xf32>
    %cst_15 = arith.constant 3.200000e+01 : f32
    %19 = vector.broadcast %cst_15 : f32 to vector<8x1xf32>
    %20 = arith.divf %18, %19 : vector<8x1xf32>
    %21 = vector.broadcast %20 : vector<8x1xf32> to vector<8x32xf32>
    %22 = arith.subf %16, %21 : vector<8x32xf32>
    %23 = arith.mulf %22, %22 : vector<8x32xf32>
    %cst_16 = arith.constant dense<0.000000e+00> : vector<8xf32>
    %24 = vector.multi_reduction <add>, %23, %cst_16 [1] : vector<8x32xf32> to vector<8xf32>
    %25 = vector.shape_cast %24 : vector<8xf32> to vector<8x1xf32>
    %cst_17 = arith.constant 3.200000e+01 : f32
    %26 = vector.broadcast %cst_17 : f32 to vector<8x1xf32>
    %27 = arith.divf %25, %26 : vector<8x1xf32>
    %28 = vector.broadcast %20 : vector<8x1xf32> to vector<8x32xf32>
    %29 = arith.subf %16, %28 : vector<8x32xf32>
    %cst_18 = arith.constant 9.99999974E-6 : f32
    %30 = vector.broadcast %cst_18 : f32 to vector<8x1xf32>
    %31 = arith.addf %27, %30 : vector<8x1xf32>
    %32 = math.rsqrt %31 : vector<8x1xf32>
    %33 = vector.broadcast %32 : vector<8x1xf32> to vector<8x32xf32>
    %34 = arith.mulf %29, %33 : vector<8x32xf32>
    %35 = vector.shape_cast %1 : vector<32xf32> to vector<1x32xf32>
    %36 = vector.broadcast %35 : vector<1x32xf32> to vector<8x32xf32>
    %37 = arith.mulf %34, %36 : vector<8x32xf32>
    %38 = vector.shape_cast %3 : vector<32xf32> to vector<1x32xf32>
    %39 = vector.broadcast %38 : vector<1x32xf32> to vector<8x32xf32>
    %40 = arith.addf %37, %39 : vector<8x32xf32>
    %cst_19 = arith.constant dense<0.000000e+00> : vector<8xf32>
    %41 = vector.multi_reduction <add>, %40, %cst_19 [1] : vector<8x32xf32> to vector<8xf32>
    %42 = vector.shape_cast %41 : vector<8xf32> to vector<8x1xf32>
    %cst_20 = arith.constant 3.200000e+01 : f32
    %43 = vector.broadcast %cst_20 : f32 to vector<8x1xf32>
    %44 = arith.divf %42, %43 : vector<8x1xf32>
    %45 = vector.broadcast %44 : vector<8x1xf32> to vector<8x32xf32>
    %46 = arith.subf %40, %45 : vector<8x32xf32>
    %47 = arith.mulf %46, %46 : vector<8x32xf32>
    %cst_21 = arith.constant dense<0.000000e+00> : vector<8xf32>
    %48 = vector.multi_reduction <add>, %47, %cst_21 [1] : vector<8x32xf32> to vector<8xf32>
    %49 = vector.shape_cast %48 : vector<8xf32> to vector<8x1xf32>
    %cst_22 = arith.constant 3.200000e+01 : f32
    %50 = vector.broadcast %cst_22 : f32 to vector<8x1xf32>
    %51 = arith.divf %49, %50 : vector<8x1xf32>
    %52 = vector.broadcast %44 : vector<8x1xf32> to vector<8x32xf32>
    %53 = arith.subf %40, %52 : vector<8x32xf32>
    %cst_23 = arith.constant 9.99999974E-6 : f32
    %54 = vector.broadcast %cst_23 : f32 to vector<8x1xf32>
    %55 = arith.addf %51, %54 : vector<8x1xf32>
    %56 = math.rsqrt %55 : vector<8x1xf32>
    %57 = vector.broadcast %56 : vector<8x1xf32> to vector<8x32xf32>
    %58 = arith.mulf %53, %57 : vector<8x32xf32>
    %59 = vector.shape_cast %5 : vector<32xf32> to vector<1x32xf32>
    %60 = vector.broadcast %59 : vector<1x32xf32> to vector<8x32xf32>
    %61 = arith.mulf %58, %60 : vector<8x32xf32>
    %62 = vector.shape_cast %7 : vector<32xf32> to vector<1x32xf32>
    %63 = vector.broadcast %62 : vector<1x32xf32> to vector<8x32xf32>
    %64 = arith.addf %61, %63 : vector<8x32xf32>
    %65 = arith.truncf %64 : vector<8x32xf32> to vector<8x32xbf16>
    %c0_24 = arith.constant 0 : index
    %c0_25 = arith.constant 0 : index
    %66 = vector.load %arg4[%c0_24, %c0_25] : memref<32x32xbf16, #tpu.memory_space<vmem>>, vector<32x32xbf16>
    %cst_26 = arith.constant dense<0.000000e+00> : vector<8x32xf32>
    %67 = tpu.matmul %65, %66, %cst_26 {dimension_numbers = #tpu.dot_dimension_numbers<[1], [0], [0], [1], [0, 0, 1, 1], [], []>} : vector<8x32xbf16>, vector<32x32xbf16>, vector<8x32xf32> -> vector<8x32xf32>
    %cst_27 = arith.constant 0.353553385 : f32
    %68 = vector.broadcast %cst_27 : f32 to vector<8x32xf32>
    %69 = arith.mulf %67, %68 : vector<8x32xf32>
    %70 = arith.truncf %69 : vector<8x32xf32> to vector<8x32xbf16>
    %cst_28 = arith.constant 0.000000e+00 : f32
    %71 = vector.broadcast %cst_28 : f32 to vector<8x32xf32>
    %72 = vector.extract_strided_slice %70 {offsets = [0, 0], sizes = [8, 8], strides = [1, 1]} : vector<8x32xbf16> to vector<8x8xbf16>
    %c0_29 = arith.constant 0 : index
    %c0_30 = arith.constant 0 : index
    %73 = vector.load %arg19[%c0_29, %c0_30] : memref<8x32xbf16, #tpu.memory_space<vmem>>, vector<8x8xbf16>
    %c0_31 = arith.constant 0 : index
    %c0_32 = arith.constant 0 : index
    %74 = vector.load %arg20[%c0_31, %c0_32] : memref<8x32xbf16, #tpu.memory_space<vmem>>, vector<8x8xbf16>
    %cst_33 = arith.constant dense<0.000000e+00> : vector<8x8xf32>
    %75 = tpu.matmul %72, %73, %cst_33 {dimension_numbers = #tpu.dot_dimension_numbers<[1], [1], [0], [0], [0, 0, 1, 0], [], []>} : vector<8x8xbf16>, vector<8x8xbf16>, vector<8x8xf32> -> vector<8x8xf32>
    %cst_34 = arith.constant dense<0xFF800000> : vector<8xf32>
    %76 = vector.multi_reduction <maximumf>, %75, %cst_34 [1] : vector<8x8xf32> to vector<8xf32>
    %77 = vector.shape_cast %76 : vector<8xf32> to vector<8x1xf32>
    %78 = vector.broadcast %77 : vector<8x1xf32> to vector<8x8xf32>
    %79 = arith.subf %75, %78 : vector<8x8xf32>
    %80 = math.exp %79 : vector<8x8xf32>
    %cst_35 = arith.constant dense<0.000000e+00> : vector<8xf32>
    %81 = vector.multi_reduction <add>, %80, %cst_35 [1] : vector<8x8xf32> to vector<8xf32>
    %82 = vector.shape_cast %81 : vector<8xf32> to vector<8x1xf32>
    %83 = tpu.reciprocal %82 {approx = true} : vector<8x1xf32> -> vector<8x1xf32>
    %84 = vector.broadcast %83 : vector<8x1xf32> to vector<8x8xf32>
    %85 = arith.mulf %80, %84 : vector<8x8xf32>
    %86 = arith.truncf %85 : vector<8x8xf32> to vector<8x8xbf16>
    %cst_36 = arith.constant dense<0.000000e+00> : vector<8x8xf32>
    %87 = tpu.matmul %86, %74, %cst_36 {dimension_numbers = #tpu.dot_dimension_numbers<[1], [0], [0], [1], [0, 0, 1, 1], [], []>} : vector<8x8xbf16>, vector<8x8xbf16>, vector<8x8xf32> -> vector<8x8xf32>
    %88 = arith.truncf %87 : vector<8x8xf32> to vector<8x8xbf16>
    %c0_37 = arith.constant 0 : index
    %c0_38 = arith.constant 0 : index
    %89 = vector.load %arg7[%c0_37, %c0_38] : memref<32x32xbf16, #tpu.memory_space<vmem>>, vector<32x8xbf16>
    %cst_39 = arith.constant dense<0.000000e+00> : vector<8x32xf32>
    %90 = tpu.matmul %88, %89, %cst_39 {dimension_numbers = #tpu.dot_dimension_numbers<[1], [1], [0], [0], [0, 0, 1, 0], [], []>} : vector<8x8xbf16>, vector<32x8xbf16>, vector<8x32xf32> -> vector<8x32xf32>
    %91 = arith.addf %71, %90 : vector<8x32xf32>
    %92 = vector.extract_strided_slice %70 {offsets = [0, 8], sizes = [8, 8], strides = [1, 1]} : vector<8x32xbf16> to vector<8x8xbf16>
    %c0_40 = arith.constant 0 : index
    %c8 = arith.constant 8 : index
    %93 = vector.load %arg19[%c0_40, %c8] : memref<8x32xbf16, #tpu.memory_space<vmem>>, vector<8x8xbf16>
    %c0_41 = arith.constant 0 : index
    %c8_42 = arith.constant 8 : index
    %94 = vector.load %arg20[%c0_41, %c8_42] : memref<8x32xbf16, #tpu.memory_space<vmem>>, vector<8x8xbf16>
    %cst_43 = arith.constant dense<0.000000e+00> : vector<8x8xf32>
    %95 = tpu.matmul %92, %93, %cst_43 {dimension_numbers = #tpu.dot_dimension_numbers<[1], [1], [0], [0], [0, 0, 1, 0], [], []>} : vector<8x8xbf16>, vector<8x8xbf16>, vector<8x8xf32> -> vector<8x8xf32>
    %cst_44 = arith.constant dense<0xFF800000> : vector<8xf32>
    %96 = vector.multi_reduction <maximumf>, %95, %cst_44 [1] : vector<8x8xf32> to vector<8xf32>
    %97 = vector.shape_cast %96 : vector<8xf32> to vector<8x1xf32>
    %98 = vector.broadcast %97 : vector<8x1xf32> to vector<8x8xf32>
    %99 = arith.subf %95, %98 : vector<8x8xf32>
    %100 = math.exp %99 : vector<8x8xf32>
    %cst_45 = arith.constant dense<0.000000e+00> : vector<8xf32>
    %101 = vector.multi_reduction <add>, %100, %cst_45 [1] : vector<8x8xf32> to vector<8xf32>
    %102 = vector.shape_cast %101 : vector<8xf32> to vector<8x1xf32>
    %103 = tpu.reciprocal %102 {approx = true} : vector<8x1xf32> -> vector<8x1xf32>
    %104 = vector.broadcast %103 : vector<8x1xf32> to vector<8x8xf32>
    %105 = arith.mulf %100, %104 : vector<8x8xf32>
    %106 = arith.truncf %105 : vector<8x8xf32> to vector<8x8xbf16>
    %cst_46 = arith.constant dense<0.000000e+00> : vector<8x8xf32>
    %107 = tpu.matmul %106, %94, %cst_46 {dimension_numbers = #tpu.dot_dimension_numbers<[1], [0], [0], [1], [0, 0, 1, 1], [], []>} : vector<8x8xbf16>, vector<8x8xbf16>, vector<8x8xf32> -> vector<8x8xf32>
    %108 = arith.truncf %107 : vector<8x8xf32> to vector<8x8xbf16>
    %c0_47 = arith.constant 0 : index
    %c8_48 = arith.constant 8 : index
    %109 = vector.load %arg7[%c0_47, %c8_48] : memref<32x32xbf16, #tpu.memory_space<vmem>>, vector<32x8xbf16>
    %cst_49 = arith.constant dense<0.000000e+00> : vector<8x32xf32>
    %110 = tpu.matmul %108, %109, %cst_49 {dimension_numbers = #tpu.dot_dimension_numbers<[1], [1], [0], [0], [0, 0, 1, 0], [], []>} : vector<8x8xbf16>, vector<32x8xbf16>, vector<8x32xf32> -> vector<8x32xf32>
    %111 = arith.addf %91, %110 : vector<8x32xf32>
    %112 = vector.extract_strided_slice %70 {offsets = [0, 16], sizes = [8, 8], strides = [1, 1]} : vector<8x32xbf16> to vector<8x8xbf16>
    %c0_50 = arith.constant 0 : index
    %c16 = arith.constant 16 : index
    %113 = vector.load %arg19[%c0_50, %c16] : memref<8x32xbf16, #tpu.memory_space<vmem>>, vector<8x8xbf16>
    %c0_51 = arith.constant 0 : index
    %c16_52 = arith.constant 16 : index
    %114 = vector.load %arg20[%c0_51, %c16_52] : memref<8x32xbf16, #tpu.memory_space<vmem>>, vector<8x8xbf16>
    %cst_53 = arith.constant dense<0.000000e+00> : vector<8x8xf32>
    %115 = tpu.matmul %112, %113, %cst_53 {dimension_numbers = #tpu.dot_dimension_numbers<[1], [1], [0], [0], [0, 0, 1, 0], [], []>} : vector<8x8xbf16>, vector<8x8xbf16>, vector<8x8xf32> -> vector<8x8xf32>
    %cst_54 = arith.constant dense<0xFF800000> : vector<8xf32>
    %116 = vector.multi_reduction <maximumf>, %115, %cst_54 [1] : vector<8x8xf32> to vector<8xf32>
    %117 = vector.shape_cast %116 : vector<8xf32> to vector<8x1xf32>
    %118 = vector.broadcast %117 : vector<8x1xf32> to vector<8x8xf32>
    %119 = arith.subf %115, %118 : vector<8x8xf32>
    %120 = math.exp %119 : vector<8x8xf32>
    %cst_55 = arith.constant dense<0.000000e+00> : vector<8xf32>
    %121 = vector.multi_reduction <add>, %120, %cst_55 [1] : vector<8x8xf32> to vector<8xf32>
    %122 = vector.shape_cast %121 : vector<8xf32> to vector<8x1xf32>
    %123 = tpu.reciprocal %122 {approx = true} : vector<8x1xf32> -> vector<8x1xf32>
    %124 = vector.broadcast %123 : vector<8x1xf32> to vector<8x8xf32>
    %125 = arith.mulf %120, %124 : vector<8x8xf32>
    %126 = arith.truncf %125 : vector<8x8xf32> to vector<8x8xbf16>
    %cst_56 = arith.constant dense<0.000000e+00> : vector<8x8xf32>
    %127 = tpu.matmul %126, %114, %cst_56 {dimension_numbers = #tpu.dot_dimension_numbers<[1], [0], [0], [1], [0, 0, 1, 1], [], []>} : vector<8x8xbf16>, vector<8x8xbf16>, vector<8x8xf32> -> vector<8x8xf32>
    %128 = arith.truncf %127 : vector<8x8xf32> to vector<8x8xbf16>
    %c0_57 = arith.constant 0 : index
    %c16_58 = arith.constant 16 : index
    %129 = vector.load %arg7[%c0_57, %c16_58] : memref<32x32xbf16, #tpu.memory_space<vmem>>, vector<32x8xbf16>
    %cst_59 = arith.constant dense<0.000000e+00> : vector<8x32xf32>
    %130 = tpu.matmul %128, %129, %cst_59 {dimension_numbers = #tpu.dot_dimension_numbers<[1], [1], [0], [0], [0, 0, 1, 0], [], []>} : vector<8x8xbf16>, vector<32x8xbf16>, vector<8x32xf32> -> vector<8x32xf32>
    %131 = arith.addf %111, %130 : vector<8x32xf32>
    %132 = vector.extract_strided_slice %70 {offsets = [0, 24], sizes = [8, 8], strides = [1, 1]} : vector<8x32xbf16> to vector<8x8xbf16>
    %c0_60 = arith.constant 0 : index
    %c24 = arith.constant 24 : index
    %133 = vector.load %arg19[%c0_60, %c24] : memref<8x32xbf16, #tpu.memory_space<vmem>>, vector<8x8xbf16>
    %c0_61 = arith.constant 0 : index
    %c24_62 = arith.constant 24 : index
    %134 = vector.load %arg20[%c0_61, %c24_62] : memref<8x32xbf16, #tpu.memory_space<vmem>>, vector<8x8xbf16>
    %cst_63 = arith.constant dense<0.000000e+00> : vector<8x8xf32>
    %135 = tpu.matmul %132, %133, %cst_63 {dimension_numbers = #tpu.dot_dimension_numbers<[1], [1], [0], [0], [0, 0, 1, 0], [], []>} : vector<8x8xbf16>, vector<8x8xbf16>, vector<8x8xf32> -> vector<8x8xf32>
    %cst_64 = arith.constant dense<0xFF800000> : vector<8xf32>
    %136 = vector.multi_reduction <maximumf>, %135, %cst_64 [1] : vector<8x8xf32> to vector<8xf32>
    %137 = vector.shape_cast %136 : vector<8xf32> to vector<8x1xf32>
    %138 = vector.broadcast %137 : vector<8x1xf32> to vector<8x8xf32>
    %139 = arith.subf %135, %138 : vector<8x8xf32>
    %140 = math.exp %139 : vector<8x8xf32>
    %cst_65 = arith.constant dense<0.000000e+00> : vector<8xf32>
    %141 = vector.multi_reduction <add>, %140, %cst_65 [1] : vector<8x8xf32> to vector<8xf32>
    %142 = vector.shape_cast %141 : vector<8xf32> to vector<8x1xf32>
    %143 = tpu.reciprocal %142 {approx = true} : vector<8x1xf32> -> vector<8x1xf32>
    %144 = vector.broadcast %143 : vector<8x1xf32> to vector<8x8xf32>
    %145 = arith.mulf %140, %144 : vector<8x8xf32>
    %146 = arith.truncf %145 : vector<8x8xf32> to vector<8x8xbf16>
    %cst_66 = arith.constant dense<0.000000e+00> : vector<8x8xf32>
    %147 = tpu.matmul %146, %134, %cst_66 {dimension_numbers = #tpu.dot_dimension_numbers<[1], [0], [0], [1], [0, 0, 1, 1], [], []>} : vector<8x8xbf16>, vector<8x8xbf16>, vector<8x8xf32> -> vector<8x8xf32>
    %148 = arith.truncf %147 : vector<8x8xf32> to vector<8x8xbf16>
    %c0_67 = arith.constant 0 : index
    %c24_68 = arith.constant 24 : index
    %149 = vector.load %arg7[%c0_67, %c24_68] : memref<32x32xbf16, #tpu.memory_space<vmem>>, vector<32x8xbf16>
    %cst_69 = arith.constant dense<0.000000e+00> : vector<8x32xf32>
    %150 = tpu.matmul %148, %149, %cst_69 {dimension_numbers = #tpu.dot_dimension_numbers<[1], [1], [0], [0], [0, 0, 1, 0], [], []>} : vector<8x8xbf16>, vector<32x8xbf16>, vector<8x32xf32> -> vector<8x32xf32>
    %151 = arith.addf %131, %150 : vector<8x32xf32>
    %152 = arith.addf %40, %151 : vector<8x32xf32>
    %cst_70 = arith.constant dense<0.000000e+00> : vector<8xf32>
    %153 = vector.multi_reduction <add>, %152, %cst_70 [1] : vector<8x32xf32> to vector<8xf32>
    %154 = vector.shape_cast %153 : vector<8xf32> to vector<8x1xf32>
    %cst_71 = arith.constant 3.200000e+01 : f32
    %155 = vector.broadcast %cst_71 : f32 to vector<8x1xf32>
    %156 = arith.divf %154, %155 : vector<8x1xf32>
    %157 = vector.broadcast %156 : vector<8x1xf32> to vector<8x32xf32>
    %158 = arith.subf %152, %157 : vector<8x32xf32>
    %159 = arith.mulf %158, %158 : vector<8x32xf32>
    %cst_72 = arith.constant dense<0.000000e+00> : vector<8xf32>
    %160 = vector.multi_reduction <add>, %159, %cst_72 [1] : vector<8x32xf32> to vector<8xf32>
    %161 = vector.shape_cast %160 : vector<8xf32> to vector<8x1xf32>
    %cst_73 = arith.constant 3.200000e+01 : f32
    %162 = vector.broadcast %cst_73 : f32 to vector<8x1xf32>
    %163 = arith.divf %161, %162 : vector<8x1xf32>
    %164 = vector.broadcast %156 : vector<8x1xf32> to vector<8x32xf32>
    %165 = arith.subf %152, %164 : vector<8x32xf32>
    %cst_74 = arith.constant 9.99999974E-6 : f32
    %166 = vector.broadcast %cst_74 : f32 to vector<8x1xf32>
    %167 = arith.addf %163, %166 : vector<8x1xf32>
    %168 = math.rsqrt %167 : vector<8x1xf32>
    %169 = vector.broadcast %168 : vector<8x1xf32> to vector<8x32xf32>
    %170 = arith.mulf %165, %169 : vector<8x32xf32>
    %171 = vector.shape_cast %9 : vector<32xf32> to vector<1x32xf32>
    %172 = vector.broadcast %171 : vector<1x32xf32> to vector<8x32xf32>
    %173 = arith.mulf %170, %172 : vector<8x32xf32>
    %174 = vector.shape_cast %11 : vector<32xf32> to vector<1x32xf32>
    %175 = vector.broadcast %174 : vector<1x32xf32> to vector<8x32xf32>
    %176 = arith.addf %173, %175 : vector<8x32xf32>
    %177 = arith.truncf %176 : vector<8x32xf32> to vector<8x32xbf16>
    %c0_75 = arith.constant 0 : index
    %c0_76 = arith.constant 0 : index
    %178 = vector.load %arg8[%c0_75, %c0_76] : memref<32x128xbf16, #tpu.memory_space<vmem>>, vector<32x128xbf16>
    %cst_77 = arith.constant dense<0.000000e+00> : vector<8x128xf32>
    %179 = tpu.matmul %177, %178, %cst_77 {dimension_numbers = #tpu.dot_dimension_numbers<[1], [0], [0], [1], [0, 0, 1, 1], [], []>} : vector<8x32xbf16>, vector<32x128xbf16>, vector<8x128xf32> -> vector<8x128xf32>
    %c0_78 = arith.constant 0 : index
    %c0_79 = arith.constant 0 : index
    %180 = vector.load %arg9[%c0_78, %c0_79] : memref<1x128xf32, #tpu.memory_space<vmem>>, vector<1x128xf32>
    %181 = vector.shape_cast %180 : vector<1x128xf32> to vector<128xf32>
    %182 = vector.shape_cast %181 : vector<128xf32> to vector<1x128xf32>
    %183 = vector.broadcast %182 : vector<1x128xf32> to vector<8x128xf32>
    %184 = arith.addf %179, %183 : vector<8x128xf32>
    %cst_80 = arith.constant 0.000000e+00 : f32
    %185 = vector.broadcast %cst_80 : f32 to vector<8x128xf32>
    %186 = arith.maximumf %184, %185 : vector<8x128xf32>
    %187 = arith.truncf %186 : vector<8x128xf32> to vector<8x128xbf16>
    %c0_81 = arith.constant 0 : index
    %c0_82 = arith.constant 0 : index
    %188 = vector.load %arg10[%c0_81, %c0_82] : memref<128x32xbf16, #tpu.memory_space<vmem>>, vector<128x32xbf16>
    %cst_83 = arith.constant dense<0.000000e+00> : vector<8x32xf32>
    %189 = tpu.matmul %187, %188, %cst_83 {dimension_numbers = #tpu.dot_dimension_numbers<[1], [0], [0], [1], [0, 0, 1, 1], [], []>} : vector<8x128xbf16>, vector<128x32xbf16>, vector<8x32xf32> -> vector<8x32xf32>
    %c0_84 = arith.constant 0 : index
    %c0_85 = arith.constant 0 : index
    %190 = vector.load %arg11[%c0_84, %c0_85] : memref<1x32xf32, #tpu.memory_space<vmem>>, vector<1x32xf32>
    %191 = vector.shape_cast %190 : vector<1x32xf32> to vector<32xf32>
    %192 = vector.shape_cast %191 : vector<32xf32> to vector<1x32xf32>
    %193 = vector.broadcast %192 : vector<1x32xf32> to vector<8x32xf32>
    %194 = arith.addf %189, %193 : vector<8x32xf32>
    %195 = arith.addf %152, %194 : vector<8x32xf32>
    %c0_86 = arith.constant 0 : index
    %c0_87 = arith.constant 0 : index
    %c0_88 = arith.constant 0 : index
    %196 = vector.load %arg18[%c0_86, %c0_87, %c0_88] : memref<1x8x32xf32, #tpu.memory_space<vmem>>, vector<1x8x32xf32>
    %197 = vector.shape_cast %196 : vector<1x8x32xf32> to vector<8x32xf32>
    %198 = vector.shape_cast %195 : vector<8x32xf32> to vector<1x8x32xf32>
    tpu.vector_store %arg18[%c0_86, %c0_87, %c0_88], %198 {strides = array<i32>} : memref<1x8x32xf32, #tpu.memory_space<vmem>>, vector<1x8x32xf32>,
    return
  }
  func.func @transform_0(%arg0: i32, %arg1: i32) -> (i32, i32, i32) {
    %c0_i32 = arith.constant 0 : i32
    %c0_i32_0 = arith.constant 0 : i32
    return %arg0, %arg1, %c0_i32 : i32, i32, i32
  }
  func.func @transform_1(%arg0: i32, %arg1: i32) -> (i32, i32, i32) {
    %c0_i32 = arith.constant 0 : i32
    %c0_i32_0 = arith.constant 0 : i32
    %c0_i32_1 = arith.constant 0 : i32
    return %arg0, %c0_i32, %c0_i32_0 : i32, i32, i32
  }
  func.func @transform_2(%arg0: i32, %arg1: i32) -> (i32, i32) {
    %c0_i32 = arith.constant 0 : i32
    %c0_i32_0 = arith.constant 0 : i32
    %c0_i32_1 = arith.constant 0 : i32
    return %c0_i32, %c0_i32_0 : i32, i32
  }
  func.func @transform_3(%arg0: i32, %arg1: i32) -> (i32, i32) {
    %c0_i32 = arith.constant 0 : i32
    %c0_i32_0 = arith.constant 0 : i32
    %c0_i32_1 = arith.constant 0 : i32
    return %c0_i32, %c0_i32_0 : i32, i32
  }
  func.func @transform_4(%arg0: i32, %arg1: i32) -> (i32, i32) {
    %c0_i32 = arith.constant 0 : i32
    %c0_i32_0 = arith.constant 0 : i32
    %c0_i32_1 = arith.constant 0 : i32
    return %c0_i32, %c0_i32_0 : i32, i32
  }
  func.func @transform_5(%arg0: i32, %arg1: i32) -> (i32, i32) {
    %c0_i32 = arith.constant 0 : i32
    %c0_i32_0 = arith.constant 0 : i32
    %c0_i32_1 = arith.constant 0 : i32
    return %c0_i32, %c0_i32_0 : i32, i32
  }
  func.func @transform_6(%arg0: i32, %arg1: i32) -> (i32, i32) {
    %c0_i32 = arith.constant 0 : i32
    %c0_i32_0 = arith.constant 0 : i32
    %c0_i32_1 = arith.constant 0 : i32
    return %c0_i32, %c0_i32_0 : i32, i32
  }
  func.func @transform_7(%arg0: i32, %arg1: i32) -> (i32, i32) {
    %c0_i32 = arith.constant 0 : i32
    %c0_i32_0 = arith.constant 0 : i32
    %c0_i32_1 = arith.constant 0 : i32
    return %c0_i32, %c0_i32_0 : i32, i32
  }
  func.func @transform_8(%arg0: i32, %arg1: i32) -> (i32, i32) {
    %c0_i32 = arith.constant 0 : i32
    %c0_i32_0 = arith.constant 0 : i32
    %c0_i32_1 = arith.constant 0 : i32
    return %c0_i32, %c0_i32_0 : i32, i32
  }
  func.func @transform_9(%arg0: i32, %arg1: i32) -> (i32, i32) {
    %c0_i32 = arith.constant 0 : i32
    %c0_i32_0 = arith.constant 0 : i32
    %c0_i32_1 = arith.constant 0 : i32
    return %c0_i32, %c0_i32_0 : i32, i32
  }
  func.func @transform_10(%arg0: i32, %arg1: i32) -> (i32, i32) {
    %c0_i32 = arith.constant 0 : i32
    %c0_i32_0 = arith.constant 0 : i32
    %c0_i32_1 = arith.constant 0 : i32
    return %c0_i32, %c0_i32_0 : i32, i32
  }
  func.func @transform_11(%arg0: i32, %arg1: i32) -> (i32, i32) {
    %c0_i32 = arith.constant 0 : i32
    %c0_i32_0 = arith.constant 0 : i32
    %c0_i32_1 = arith.constant 0 : i32
    return %c0_i32, %c0_i32_0 : i32, i32
  }
  func.func @transform_12(%arg0: i32, %arg1: i32) -> (i32, i32) {
    %c0_i32 = arith.constant 0 : i32
    %c0_i32_0 = arith.constant 0 : i32
    %c0_i32_1 = arith.constant 0 : i32
    return %c0_i32, %c0_i32_0 : i32, i32
  }
  func.func @transform_13(%arg0: i32, %arg1: i32) -> (i32, i32) {
    %c0_i32 = arith.constant 0 : i32
    %c0_i32_0 = arith.constant 0 : i32
    %c0_i32_1 = arith.constant 0 : i32
    return %c0_i32, %c0_i32_0 : i32, i32
  }
  func.func @transform_14(%arg0: i32, %arg1: i32) -> (i32, i32) {
    %c0_i32 = arith.constant 0 : i32
    %c0_i32_0 = arith.constant 0 : i32
    %c0_i32_1 = arith.constant 0 : i32
    return %c0_i32, %c0_i32_0 : i32, i32
  }
  func.func @transform_15(%arg0: i32, %arg1: i32) -> (i32, i32) {
    %c0_i32 = arith.constant 0 : i32
    %c0_i32_0 = arith.constant 0 : i32
    %c0_i32_1 = arith.constant 0 : i32
    return %c0_i32, %c0_i32_0 : i32, i32
  }
  func.func @transform_16(%arg0: i32, %arg1: i32) -> (i32, i32, i32) {
    %c0_i32 = arith.constant 0 : i32
    %c0_i32_0 = arith.constant 0 : i32
    return %arg0, %arg1, %c0_i32 : i32, i32, i32
  }
}

</mosaic_0001>

<llo_original>
// kernel: tpu_custom_call.1
$region0: #{tpu_custom_call.1}
  #allocation0 [shape = 'u32[]', space=smem, size = 0x4, offset = 0x4, fixed_abs, tag = 'smem constant byte address 0x4 - core index']
  #allocation1 [shape = 'u32[144,128]{1,0:T(1,128)}', space=vmem, size = 0x12000, scoped, tag = 'internal scratch']
  #allocation2 [shape = 'bf16[8,32]{1,0:T(8,128)(2,1)}', space=vmem, size = 0x800, scoped, tag = 'scratch operand']
  #allocation3 [shape = 'bf16[8,32]{1,0:T(8,128)(2,1)}', space=vmem, size = 0x800, scoped, tag = 'scratch operand']
  %s0 = inlined_call_operand.hbm [shape: f32[2,8,32], index: 0, kind: input, shape index: {}]
  %s1 = inlined_call_operand.hbm [shape: f32[2,8,32], index: 1, kind: input, shape index: {}]
  %s2 = inlined_call_operand.hbm [shape: bf16[32,32], index: 2, kind: input, shape index: {}]
  %s3 = inlined_call_operand.hbm [shape: bf16[32,32], index: 3, kind: input, shape index: {}]
  %s4 = inlined_call_operand.hbm [shape: bf16[32,32], index: 4, kind: input, shape index: {}]
  %s5 = inlined_call_operand.hbm [shape: bf16[32,32], index: 5, kind: input, shape index: {}]
  %s6 = inlined_call_operand.hbm [shape: bf16[32,128], index: 6, kind: input, shape index: {}]
  %s7 = inlined_call_operand.hbm [shape: f32[1,128], index: 7, kind: input, shape index: {}]
  %s8 = inlined_call_operand.hbm [shape: bf16[128,32], index: 8, kind: input, shape index: {}]
  %s9 = inlined_call_operand.hbm [shape: f32[1,32], index: 9, kind: input, shape index: {}]
  %s10 = inlined_call_operand.hbm [shape: f32[1,32], index: 10, kind: input, shape index: {}]
  %s11 = inlined_call_operand.hbm [shape: f32[1,32], index: 11, kind: input, shape index: {}]
  %s12 = inlined_call_operand.hbm [shape: f32[1,32], index: 12, kind: input, shape index: {}]
  %s13 = inlined_call_operand.hbm [shape: f32[1,32], index: 13, kind: input, shape index: {}]
  %s14 = inlined_call_operand.hbm [shape: f32[1,32], index: 14, kind: input, shape index: {}]
  %s15 = inlined_call_operand.hbm [shape: f32[1,32], index: 15, kind: input, shape index: {}]
  %s16 = inlined_call_operand.hbm [shape: f32[2,8,32], index: 16, kind: output, shape index: {}]
  %s17 = sld [smem:[#allocation0]]
  $region165: #{tpu_custom_call.1} parent=0
    _
  %s19 = ssub.s32 1, %s17
  %s20 = scalar_select 0, %s19, %s17
  $region1: #{tpu_custom_call.1} parent=0
    #allocation4 [shape = 'u8[8192]{0}', space=vmem, size = 0x2000, scoped, tag = 'input window, operand 0']
    #allocation5 [shape = 's32[2]{0}', space=sflag, size = 0x8, scoped, tag = 'scoped memory for tpu_custom_call.1']
    #allocation6 [shape = 's32[2]{0}', space=sflag, size = 0x8, scoped, tag = 'scoped memory for tpu_custom_call.1']
    #allocation7 [shape = 'u8[8192]{0}', space=vmem, size = 0x2000, scoped, tag = 'input window, operand 1']
    #allocation8 [shape = 's32[2]{0}', space=sflag, size = 0x8, scoped, tag = 'scoped memory for tpu_custom_call.1']
    #allocation9 [shape = 'u8[8192]{0}', space=vmem, size = 0x2000, scoped, tag = 'input window, operand 2, single buffered']
    #allocation10 [shape = 'u8[8192]{0}', space=vmem, size = 0x2000, scoped, tag = 'input window, operand 3, single buffered']
    #allocation11 [shape = 's32[1]{0}', space=sflag, size = 0x4, scoped, tag = 'scoped memory for tpu_custom_call.1']
    #allocation12 [shape = 'u8[8192]{0}', space=vmem, size = 0x2000, scoped, tag = 'input window, operand 4, single buffered']
    #allocation13 [shape = 'u8[8192]{0}', space=vmem, size = 0x2000, scoped, tag = 'input window, operand 5, single buffered']
    #allocation14 [shape = 's32[1]{0}', space=sflag, size = 0x4, scoped, tag = 'scoped memory for tpu_custom_call.1']
    #allocation15 [shape = 'u8[8192]{0}', space=vmem, size = 0x2000, scoped, tag = 'input window, operand 6, single buffered']
    #allocation16 [shape = 'u8[512]{0}', space=vmem, size = 0x400, scoped, tag = 'input window, operand 7, single buffered']
    #allocation17 [shape = 's32[1]{0}', space=sflag, size = 0x4, scoped, tag = 'scoped memory for tpu_custom_call.1']
    #allocation18 [shape = 'u8[32768]{0}', space=vmem, size = 0x8000, scoped, tag = 'input window, operand 8, single buffered']
    #allocation19 [shape = 'u8[512]{0}', space=vmem, size = 0x400, scoped, tag = 'input window, operand 9, single buffered']
    #allocation20 [shape = 's32[1]{0}', space=sflag, size = 0x4, scoped, tag = 'scoped memory for tpu_custom_call.1']
    #allocation21 [shape = 'u8[512]{0}', space=vmem, size = 0x400, scoped, tag = 'input window, operand 10, single buffered']
    #allocation22 [shape = 'u8[512]{0}', space=vmem, size = 0x400, scoped, tag = 'input window, operand 11, single buffered']
    #allocation23 [shape = 's32[1]{0}', space=sflag, size = 0x4, scoped, tag = 'scoped memory for tpu_custom_call.1']
    #allocation24 [shape = 'u8[512]{0}', space=vmem, size = 0x400, scoped, tag = 'input window, operand 12, single buffered']
    #allocation25 [shape = 'u8[512]{0}', space=vmem, size = 0x400, scoped, tag = 'input window, operand 13, single buffered']
    #allocation26 [shape = 's32[1]{0}', space=sflag, size = 0x4, scoped, tag = 'scoped memory for tpu_custom_call.1']
    #allocation27 [shape = 'u8[512]{0}', space=vmem, size = 0x400, scoped, tag = 'input window, operand 14, single buffered']
    #allocation28 [shape = 'u8[512]{0}', space=vmem, size = 0x400, scoped, tag = 'input window, operand 15, single buffered']
    #allocation29 [shape = 's32[1]{0}', space=sflag, size = 0x4, scoped, tag = 'scoped memory for tpu_custom_call.1']
    #allocation30 [shape = 'u8[8192]{0}', space=vmem, size = 0x2000, scoped, tag = 'output window, operand 0']
    %21 = vsyncpa [#allocation5], 0
    %s22 = scalar_lea.sflag [#allocation5], 1
    %23 = vsyncpa %s22, 0
    %24 = vsyncpa [#allocation8], 0
    %s25 = scalar_lea.sflag [#allocation8], 1
    %26 = vsyncpa %s25, 0
    %27 = vsyncpa [#allocation11], 0
    %28 = vsyncpa [#allocation14], 0
    %29 = vsyncpa [#allocation17], 0
    %30 = vsyncpa [#allocation20], 0
    %31 = vsyncpa [#allocation23], 0
    %32 = vsyncpa [#allocation26], 0
    %33 = vsyncpa [#allocation29], 0
    %34 = vsyncpa [#allocation6], 0
    %s35 = scalar_lea.sflag [#allocation6], 1
    %36 = vsyncpa %s35, 0
    loop: start=0, step=1, limit=4
    $region2: #{tpu_custom_call.1} parent=1 // loop_pre_header
      _
    $region3: #{tpu_custom_call.1} parent=1 // loop_header
      %s38 = sphi 0, %s42
      %p39 = scmp.ge.s32.totalorder %s38, 4
      %s45 = sphi 0, %s57
      %s46 = sphi 0, %s53
      %s47 = sphi 0, %s45
      %s48 = sphi 0, %s46
      %s49 = sphi 0, %s47
      %s50 = sphi 0, %s48
      %s62 = sphi 0, %s64
      %s65 = sphi 0, %s62
      %s66 = sphi 0, %s65
      %s82 = sphi 0, %s66
      %s88 = sphi 0, %s90
      %s91 = sphi 0, %s88
      %s92 = sphi 0, %s91
      %s108 = sphi 0, %s92
      %s112 = sphi 0, %s112
      %s114 = sphi 0, %s112
      %s115 = sphi 0, %s114
      %s129 = sphi 0, %s115
      %s133 = sphi 0, %s133
      %s135 = sphi 0, %s133
      %s136 = sphi 0, %s135
      %s150 = sphi 0, %s136
      %s154 = sphi 0, %s154
      %s156 = sphi 0, %s154
      %s157 = sphi 0, %s156
      %s171 = sphi 0, %s157
      %s175 = sphi 0, %s175
      %s177 = sphi 0, %s175
      %s178 = sphi 0, %s177
      %s192 = sphi 0, %s178
      %s196 = sphi 0, %s196
      %s198 = sphi 0, %s196
      %s199 = sphi 0, %s198
      %s213 = sphi 0, %s199
      %s217 = sphi 0, %s217
      %s219 = sphi 0, %s217
      %s220 = sphi 0, %s219
      %s234 = sphi 0, %s220
      %s238 = sphi 0, %s238
      %s240 = sphi 0, %s238
      %s241 = sphi 0, %s240
      %s255 = sphi 0, %s241
      %s259 = sphi 0, %s259
      %s261 = sphi 0, %s259
      %s262 = sphi 0, %s261
      %s276 = sphi 0, %s262
      %s280 = sphi 0, %s280
      %s282 = sphi 0, %s280
      %s283 = sphi 0, %s282
      %s297 = sphi 0, %s283
      %s301 = sphi 0, %s301
      %s303 = sphi 0, %s301
      %s304 = sphi 0, %s303
      %s318 = sphi 0, %s304
      %s322 = sphi 0, %s322
      %s324 = sphi 0, %s322
      %s325 = sphi 0, %s324
      %s339 = sphi 0, %s325
      %s343 = sphi 0, %s343
      %s345 = sphi 0, %s343
      %s346 = sphi 0, %s345
      %s360 = sphi 0, %s346
      %s364 = sphi 0, %s364
      %s366 = sphi 0, %s364
      %s367 = sphi 0, %s366
      %s381 = sphi 0, %s367
      %s385 = sphi 0, %s385
      %s387 = sphi 0, %s385
      %s388 = sphi 0, %s387
      %s402 = sphi 0, %s388
      %s410 = sphi 0, %s412
      %s413 = sphi 0, %s410
      %s414 = sphi 0, %s413
      %s430 = sphi 0, %s414
    $region4: #{tpu_custom_call.1} parent=1 // loop_header_branch
      %41 = sbr.rel (%p39) target = $region8
    $region5: #{tpu_custom_call.1} parent=1 // loop_body
      %s43 = ssub.s32 %s38, 1
      %s44 = ssub.s32 %s38, 2
      %s51 = sadd.s32 1, %s46
      %p52 = scmp.ge.s32.totalorder %s51, 1
      %s53 = scalar_select %p52, 0, %s51
      %s54 = sadd.s32 1, %s45
      %s55 = scalar_select %p52, %s54, %s45
      %p56 = scmp.ge.s32.totalorder %s55, 2
      %s57 = scalar_select %p56, 0, %s55
      %s58 = ssub.s32 %s45, %s57
      %s59 = ssub.s32 %s46, %s53
      %s60 = sor.u32 %s58, %s59
      %p61 = scmp.eq.s32.totalorder %s60, 0
      %s63 = sadd.s32 %s62, 1
      %s64 = scalar_select %p61, %s62, %s63
      %p67 = pneg %p61
      %p68 = scmp.eq.s32.totalorder %s38, 1
      %p69 = por %p67, %p68
      %p70 = scmp.ne.s32.totalorder %s62, %s65
      %p71 = scmp.eq.s32.totalorder %s38, 0
      %p72 = por %p70, %p71
      %p73 = scmp.ne.s32.totalorder %s62, %s65
      %p74 = scmp.eq.s32.totalorder %s43, 1
      %p75 = por %p73, %p74
      %p76 = scmp.ne.s32.totalorder %s65, %s66
      %p77 = scmp.eq.s32.totalorder %s43, 0
      %p78 = por %p76, %p77
      %p79 = scmp.ne.s32.totalorder %s65, %s66
      %p80 = scmp.eq.s32.totalorder %s44, 1
      %p81 = por %p79, %p80
      %p83 = scmp.ne.s32.totalorder %s66, %s82
      %p84 = scmp.eq.s32.totalorder %s44, 0
      %p85 = por %p83, %p84
      %s86 = ssub.s32 %s45, %s57
      %p87 = scmp.eq.s32.totalorder %s86, 0
      %s89 = sadd.s32 %s88, 1
      %s90 = scalar_select %p87, %s88, %s89
      %p93 = pneg %p87
      %p94 = scmp.eq.s32.totalorder %s38, 1
      %p95 = por %p93, %p94
      %p96 = scmp.ne.s32.totalorder %s88, %s91
      %p97 = scmp.eq.s32.totalorder %s38, 0
      %p98 = por %p96, %p97
      %p99 = scmp.ne.s32.totalorder %s88, %s91
      %p100 = scmp.eq.s32.totalorder %s43, 1
      %p101 = por %p99, %p100
      %p102 = scmp.ne.s32.totalorder %s91, %s92
      %p103 = scmp.eq.s32.totalorder %s43, 0
      %p104 = por %p102, %p103
      %p105 = scmp.ne.s32.totalorder %s91, %s92
      %p106 = scmp.eq.s32.totalorder %s44, 1
      %p107 = por %p105, %p106
      %p109 = scmp.ne.s32.totalorder %s92, %s108
      %p110 = scmp.eq.s32.totalorder %s44, 0
      %p111 = por %p109, %p110
      %s113 = sadd.s32 %s112, 1
      %p116 = scmp.eq.s32.totalorder %s38, 1
      %p117 = scmp.ne.s32.totalorder %s112, %s114
      %p118 = scmp.eq.s32.totalorder %s38, 0
      %p119 = por %p117, %p118
      %p120 = scmp.ne.s32.totalorder %s112, %s114
      %p121 = scmp.eq.s32.totalorder %s43, 1
      %p122 = por %p120, %p121
      %p123 = scmp.ne.s32.totalorder %s114, %s115
      %p124 = scmp.eq.s32.totalorder %s43, 0
      %p125 = por %p123, %p124
      %p126 = scmp.ne.s32.totalorder %s114, %s115
      %p127 = scmp.eq.s32.totalorder %s44, 1
      %p128 = por %p126, %p127
      %p130 = scmp.ne.s32.totalorder %s115, %s129
      %p131 = scmp.eq.s32.totalorder %s44, 0
      %p132 = por %p130, %p131
      %s134 = sadd.s32 %s133, 1
      %p137 = scmp.eq.s32.totalorder %s38, 1
      %p138 = scmp.ne.s32.totalorder %s133, %s135
      %p139 = scmp.eq.s32.totalorder %s38, 0
      %p140 = por %p138, %p139
      %p141 = scmp.ne.s32.totalorder %s133, %s135
      %p142 = scmp.eq.s32.totalorder %s43, 1
      %p143 = por %p141, %p142
      %p144 = scmp.ne.s32.totalorder %s135, %s136
      %p145 = scmp.eq.s32.totalorder %s43, 0
      %p146 = por %p144, %p145
      %p147 = scmp.ne.s32.totalorder %s135, %s136
      %p148 = scmp.eq.s32.totalorder %s44, 1
      %p149 = por %p147, %p148
      %p151 = scmp.ne.s32.totalorder %s136, %s150
      %p152 = scmp.eq.s32.totalorder %s44, 0
      %p153 = por %p151, %p152
      %s155 = sadd.s32 %s154, 1
      %p158 = scmp.eq.s32.totalorder %s38, 1
      %p159 = scmp.ne.s32.totalorder %s154, %s156
      %p160 = scmp.eq.s32.totalorder %s38, 0
      %p161 = por %p159, %p160
      %p162 = scmp.ne.s32.totalorder %s154, %s156
      %p163 = scmp.eq.s32.totalorder %s43, 1
      %p164 = por %p162, %p163
      %p165 = scmp.ne.s32.totalorder %s156, %s157
      %p166 = scmp.eq.s32.totalorder %s43, 0
      %p167 = por %p165, %p166
      %p168 = scmp.ne.s32.totalorder %s156, %s157
      %p169 = scmp.eq.s32.totalorder %s44, 1
      %p170 = por %p168, %p169
      %p172 = scmp.ne.s32.totalorder %s157, %s171
      %p173 = scmp.eq.s32.totalorder %s44, 0
      %p174 = por %p172, %p173
      %s176 = sadd.s32 %s175, 1
      %p179 = scmp.eq.s32.totalorder %s38, 1
      %p180 = scmp.ne.s32.totalorder %s175, %s177
      %p181 = scmp.eq.s32.totalorder %s38, 0
      %p182 = por %p180, %p181
      %p183 = scmp.ne.s32.totalorder %s175, %s177
      %p184 = scmp.eq.s32.totalorder %s43, 1
      %p185 = por %p183, %p184
      %p186 = scmp.ne.s32.totalorder %s177, %s178
      %p187 = scmp.eq.s32.totalorder %s43, 0
      %p188 = por %p186, %p187
      %p189 = scmp.ne.s32.totalorder %s177, %s178
      %p190 = scmp.eq.s32.totalorder %s44, 1
      %p191 = por %p189, %p190
      %p193 = scmp.ne.s32.totalorder %s178, %s192
      %p194 = scmp.eq.s32.totalorder %s44, 0
      %p195 = por %p193, %p194
      %s197 = sadd.s32 %s196, 1
      %p200 = scmp.eq.s32.totalorder %s38, 1
      %p201 = scmp.ne.s32.totalorder %s196, %s198
      %p202 = scmp.eq.s32.totalorder %s38, 0
      %p203 = por %p201, %p202
      %p204 = scmp.ne.s32.totalorder %s196, %s198
      %p205 = scmp.eq.s32.totalorder %s43, 1
      %p206 = por %p204, %p205
      %p207 = scmp.ne.s32.totalorder %s198, %s199
      %p208 = scmp.eq.s32.totalorder %s43, 0
      %p209 = por %p207, %p208
      %p210 = scmp.ne.s32.totalorder %s198, %s199
      %p211 = scmp.eq.s32.totalorder %s44, 1
      %p212 = por %p210, %p211
      %p214 = scmp.ne.s32.totalorder %s199, %s213
      %p215 = scmp.eq.s32.totalorder %s44, 0
      %p216 = por %p214, %p215
      %s218 = sadd.s32 %s217, 1
      %p221 = scmp.eq.s32.totalorder %s38, 1
      %p222 = scmp.ne.s32.totalorder %s217, %s219
      %p223 = scmp.eq.s32.totalorder %s38, 0
      %p224 = por %p222, %p223
      %p225 = scmp.ne.s32.totalorder %s217, %s219
      %p226 = scmp.eq.s32.totalorder %s43, 1
      %p227 = por %p225, %p226
      %p228 = scmp.ne.s32.totalorder %s219, %s220
      %p229 = scmp.eq.s32.totalorder %s43, 0
      %p230 = por %p228, %p229
      %p231 = scmp.ne.s32.totalorder %s219, %s220
      %p232 = scmp.eq.s32.totalorder %s44, 1
      %p233 = por %p231, %p232
      %p235 = scmp.ne.s32.totalorder %s220, %s234
      %p236 = scmp.eq.s32.totalorder %s44, 0
      %p237 = por %p235, %p236
      %s239 = sadd.s32 %s238, 1
      %p242 = scmp.eq.s32.totalorder %s38, 1
      %p243 = scmp.ne.s32.totalorder %s238, %s240
      %p244 = scmp.eq.s32.totalorder %s38, 0
      %p245 = por %p243, %p244
      %p246 = scmp.ne.s32.totalorder %s238, %s240
      %p247 = scmp.eq.s32.totalorder %s43, 1
      %p248 = por %p246, %p247
      %p249 = scmp.ne.s32.totalorder %s240, %s241
      %p250 = scmp.eq.s32.totalorder %s43, 0
      %p251 = por %p249, %p250
      %p252 = scmp.ne.s32.totalorder %s240, %s241
      %p253 = scmp.eq.s32.totalorder %s44, 1
      %p254 = por %p252, %p253
      %p256 = scmp.ne.s32.totalorder %s241, %s255
      %p257 = scmp.eq.s32.totalorder %s44, 0
      %p258 = por %p256, %p257
      %s260 = sadd.s32 %s259, 1
      %p263 = scmp.eq.s32.totalorder %s38, 1
      %p264 = scmp.ne.s32.totalorder %s259, %s261
      %p265 = scmp.eq.s32.totalorder %s38, 0
      %p266 = por %p264, %p265
      %p267 = scmp.ne.s32.totalorder %s259, %s261
      %p268 = scmp.eq.s32.totalorder %s43, 1
      %p269 = por %p267, %p268
      %p270 = scmp.ne.s32.totalorder %s261, %s262
      %p271 = scmp.eq.s32.totalorder %s43, 0
      %p272 = por %p270, %p271
      %p273 = scmp.ne.s32.totalorder %s261, %s262
      %p274 = scmp.eq.s32.totalorder %s44, 1
      %p275 = por %p273, %p274
      %p277 = scmp.ne.s32.totalorder %s262, %s276
      %p278 = scmp.eq.s32.totalorder %s44, 0
      %p279 = por %p277, %p278
      %s281 = sadd.s32 %s280, 1
      %p284 = scmp.eq.s32.totalorder %s38, 1
      %p285 = scmp.ne.s32.totalorder %s280, %s282
      %p286 = scmp.eq.s32.totalorder %s38, 0
      %p287 = por %p285, %p286
      %p288 = scmp.ne.s32.totalorder %s280, %s282
      %p289 = scmp.eq.s32.totalorder %s43, 1
      %p290 = por %p288, %p289
      %p291 = scmp.ne.s32.totalorder %s282, %s283
      %p292 = scmp.eq.s32.totalorder %s43, 0
      %p293 = por %p291, %p292
      %p294 = scmp.ne.s32.totalorder %s282, %s283
      %p295 = scmp.eq.s32.totalorder %s44, 1
      %p296 = por %p294, %p295
      %p298 = scmp.ne.s32.totalorder %s283, %s297
      %p299 = scmp.eq.s32.totalorder %s44, 0
      %p300 = por %p298, %p299
      %s302 = sadd.s32 %s301, 1
      %p305 = scmp.eq.s32.totalorder %s38, 1
      %p306 = scmp.ne.s32.totalorder %s301, %s303
      %p307 = scmp.eq.s32.totalorder %s38, 0
      %p308 = por %p306, %p307
      %p309 = scmp.ne.s32.totalorder %s301, %s303
      %p310 = scmp.eq.s32.totalorder %s43, 1
      %p311 = por %p309, %p310
      %p312 = scmp.ne.s32.totalorder %s303, %s304
      %p313 = scmp.eq.s32.totalorder %s43, 0
      %p314 = por %p312, %p313
      %p315 = scmp.ne.s32.totalorder %s303, %s304
      %p316 = scmp.eq.s32.totalorder %s44, 1
      %p317 = por %p315, %p316
      %p319 = scmp.ne.s32.totalorder %s304, %s318
      %p320 = scmp.eq.s32.totalorder %s44, 0
      %p321 = por %p319, %p320
      %s323 = sadd.s32 %s322, 1
      %p326 = scmp.eq.s32.totalorder %s38, 1
      %p327 = scmp.ne.s32.totalorder %s322, %s324
      %p328 = scmp.eq.s32.totalorder %s38, 0
      %p329 = por %p327, %p328
      %p330 = scmp.ne.s32.totalorder %s322, %s324
      %p331 = scmp.eq.s32.totalorder %s43, 1
      %p332 = por %p330, %p331
      %p333 = scmp.ne.s32.totalorder %s324, %s325
      %p334 = scmp.eq.s32.totalorder %s43, 0
      %p335 = por %p333, %p334
      %p336 = scmp.ne.s32.totalorder %s324, %s325
      %p337 = scmp.eq.s32.totalorder %s44, 1
      %p338 = por %p336, %p337
      %p340 = scmp.ne.s32.totalorder %s325, %s339
      %p341 = scmp.eq.s32.totalorder %s44, 0
      %p342 = por %p340, %p341
      %s344 = sadd.s32 %s343, 1
      %p347 = scmp.eq.s32.totalorder %s38, 1
      %p348 = scmp.ne.s32.totalorder %s343, %s345
      %p349 = scmp.eq.s32.totalorder %s38, 0
      %p350 = por %p348, %p349
      %p351 = scmp.ne.s32.totalorder %s343, %s345
      %p352 = scmp.eq.s32.totalorder %s43, 1
      %p353 = por %p351, %p352
      %p354 = scmp.ne.s32.totalorder %s345, %s346
      %p355 = scmp.eq.s32.totalorder %s43, 0
      %p356 = por %p354, %p355
      %p357 = scmp.ne.s32.totalorder %s345, %s346
      %p358 = scmp.eq.s32.totalorder %s44, 1
      %p359 = por %p357, %p358
      %p361 = scmp.ne.s32.totalorder %s346, %s360
      %p362 = scmp.eq.s32.totalorder %s44, 0
      %p363 = por %p361, %p362
      %s365 = sadd.s32 %s364, 1
      %p368 = scmp.eq.s32.totalorder %s38, 1
      %p369 = scmp.ne.s32.totalorder %s364, %s366
      %p370 = scmp.eq.s32.totalorder %s38, 0
      %p371 = por %p369, %p370
      %p372 = scmp.ne.s32.totalorder %s364, %s366
      %p373 = scmp.eq.s32.totalorder %s43, 1
      %p374 = por %p372, %p373
      %p375 = scmp.ne.s32.totalorder %s366, %s367
      %p376 = scmp.eq.s32.totalorder %s43, 0
      %p377 = por %p375, %p376
      %p378 = scmp.ne.s32.totalorder %s366, %s367
      %p379 = scmp.eq.s32.totalorder %s44, 1
      %p380 = por %p378, %p379
      %p382 = scmp.ne.s32.totalorder %s367, %s381
      %p383 = scmp.eq.s32.totalorder %s44, 0
      %p384 = por %p382, %p383
      %s386 = sadd.s32 %s385, 1
      %p389 = scmp.eq.s32.totalorder %s38, 1
      %p390 = scmp.ne.s32.totalorder %s385, %s387
      %p391 = scmp.eq.s32.totalorder %s38, 0
      %p392 = por %p390, %p391
      %p393 = scmp.ne.s32.totalorder %s385, %s387
      %p394 = scmp.eq.s32.totalorder %s43, 1
      %p395 = por %p393, %p394
      %p396 = scmp.ne.s32.totalorder %s387, %s388
      %p397 = scmp.eq.s32.totalorder %s43, 0
      %p398 = por %p396, %p397
      %p399 = scmp.ne.s32.totalorder %s387, %s388
      %p400 = scmp.eq.s32.totalorder %s44, 1
      %p401 = por %p399, %p400
      %p403 = scmp.ne.s32.totalorder %s388, %s402
      %p404 = scmp.eq.s32.totalorder %s44, 0
      %p405 = por %p403, %p404
      %s406 = ssub.s32 %s45, %s57
      %s407 = ssub.s32 %s46, %s53
      %s408 = sor.u32 %s406, %s407
      %p409 = scmp.eq.s32.totalorder %s408, 0
      %s411 = sadd.s32 %s410, 1
      %s412 = scalar_select %p409, %s410, %s411
      %p415 = pneg %p409
      %p416 = scmp.eq.s32.totalorder %s38, 1
      %p417 = por %p415, %p416
      %p418 = scmp.ne.s32.totalorder %s410, %s413
      %p419 = scmp.eq.s32.totalorder %s38, 0
      %p420 = por %p418, %p419
      %p421 = scmp.ne.s32.totalorder %s410, %s413
      %p422 = scmp.eq.s32.totalorder %s43, 1
      %p423 = por %p421, %p422
      %p424 = scmp.ne.s32.totalorder %s413, %s414
      %p425 = scmp.eq.s32.totalorder %s43, 0
      %p426 = por %p424, %p425
      %p427 = scmp.ne.s32.totalorder %s413, %s414
      %p428 = scmp.eq.s32.totalorder %s44, 1
      %p429 = por %p427, %p428
      %p431 = scmp.ne.s32.totalorder %s414, %s430
      %p432 = scmp.eq.s32.totalorder %s44, 0
      %p433 = por %p431, %p432
      %p434 = scmp.le.s32.totalorder 1, %s38
      %p435 = scmp.lt.s32.totalorder %s38, 3
      %p436 = pnand %p434, %p435
      %p437 = pneg %p436
      // Predicated region
      $region9: #{tpu_custom_call.1} parent=5 // pred_check
        _
      $region10: #{tpu_custom_call.1} parent=5 // pred_check_branch
        %439 = sbr.rel (%p436) target = $region12
      $region11: #{tpu_custom_call.1} parent=5 // pred_region
        %s440 = ssub.s32 %s38, 1
        // Predicated region
        $region13: #{tpu_custom_call.1} parent=11 // pred_check
          %p441 = pneg %p125
        $region14: #{tpu_custom_call.1} parent=11 // pred_check_branch
          %443 = sbr.rel (%p441) target = $region16
        $region15: #{tpu_custom_call.1} parent=11 // pred_region
          %s445 = ssub.s32 256, 256
          %446 = vsyncadd [#allocation8], %s445
          %s447 = sshll.u32 [#allocation9], 4
          %s448 = int_to_ptr.vmem [resolvable:$true] %s447
          %453 = dma.hbm_to_vmem [thread:$0]  %s2, 256, %s448, [#allocation8], 64, 64, 4
        $region16: #{tpu_custom_call.1} parent=11 // pred_fallthru
          _
        // Predicated region
        $region17: #{tpu_custom_call.1} parent=11 // pred_check
          %p454 = pneg %p146
        $region18: #{tpu_custom_call.1} parent=11 // pred_check_branch
          %456 = sbr.rel (%p454) target = $region20
        $region19: #{tpu_custom_call.1} parent=11 // pred_region
          %s458 = ssub.s32 256, 256
          %459 = vsyncadd [#allocation11], %s458
          %s460 = sshll.u32 [#allocation10], 4
          %s461 = int_to_ptr.vmem [resolvable:$true] %s460
          %466 = dma.hbm_to_vmem [thread:$0]  %s3, 256, %s461, [#allocation11], 64, 64, 4
        $region20: #{tpu_custom_call.1} parent=11 // pred_fallthru
          _
        // Predicated region
        $region21: #{tpu_custom_call.1} parent=11 // pred_check
          %p467 = pneg %p167
        $region22: #{tpu_custom_call.1} parent=11 // pred_check_branch
          %469 = sbr.rel (%p467) target = $region24
        $region23: #{tpu_custom_call.1} parent=11 // pred_region
          %s471 = ssub.s32 256, 256
          %472 = vsyncadd [#allocation11], %s471
          %s473 = sshll.u32 [#allocation12], 4
          %s474 = int_to_ptr.vmem [resolvable:$true] %s473
          %479 = dma.hbm_to_vmem [thread:$0]  %s4, 256, %s474, [#allocation11], 64, 64, 4
        $region24: #{tpu_custom_call.1} parent=11 // pred_fallthru
          _
        // Predicated region
        $region25: #{tpu_custom_call.1} parent=11 // pred_check
          %p480 = pneg %p188
        $region26: #{tpu_custom_call.1} parent=11 // pred_check_branch
          %482 = sbr.rel (%p480) target = $region28
        $region27: #{tpu_custom_call.1} parent=11 // pred_region
          %s484 = ssub.s32 256, 256
          %485 = vsyncadd [#allocation14], %s484
          %s486 = sshll.u32 [#allocation13], 4
          %s487 = int_to_ptr.vmem [resolvable:$true] %s486
          %492 = dma.hbm_to_vmem [thread:$0]  %s5, 256, %s487, [#allocation14], 64, 64, 4
        $region28: #{tpu_custom_call.1} parent=11 // pred_fallthru
          _
        // Predicated region
        $region29: #{tpu_custom_call.1} parent=11 // pred_check
          %p493 = pneg %p209
        $region30: #{tpu_custom_call.1} parent=11 // pred_check_branch
          %495 = sbr.rel (%p493) target = $region32
        $region31: #{tpu_custom_call.1} parent=11 // pred_region
          %s497 = ssub.s32 256, 256
          %498 = vsyncadd [#allocation14], %s497
          %s499 = sshll.u32 [#allocation15], 4
          %s500 = int_to_ptr.vmem [resolvable:$true] %s499
          %505 = dma.hbm_to_vmem [thread:$0]  %s6, 256, %s500, [#allocation14], 64, 64, 4
        $region32: #{tpu_custom_call.1} parent=11 // pred_fallthru
          _
        // Predicated region
        $region33: #{tpu_custom_call.1} parent=11 // pred_check
          %p506 = pneg %p230
        $region34: #{tpu_custom_call.1} parent=11 // pred_check_branch
          %508 = sbr.rel (%p506) target = $region36
        $region35: #{tpu_custom_call.1} parent=11 // pred_region
          %s510 = ssub.s32 16, 16
          %511 = vsyncadd [#allocation17], %s510
          %s513 = sshll.u32 [#allocation16], 4
          %s514 = int_to_ptr.vmem [resolvable:$true] %s513
          %516 = dma.hbm_to_vmem [thread:$0]  %s7, 16, %s514, [#allocation17]
        $region36: #{tpu_custom_call.1} parent=11 // pred_fallthru
          _
        // Predicated region
        $region37: #{tpu_custom_call.1} parent=11 // pred_check
          %p517 = pneg %p251
        $region38: #{tpu_custom_call.1} parent=11 // pred_check_branch
          %519 = sbr.rel (%p517) target = $region40
        $region39: #{tpu_custom_call.1} parent=11 // pred_region
          %s521 = ssub.s32 1024, 1024
          %522 = vsyncadd [#allocation17], %s521
          %s523 = sshll.u32 [#allocation18], 4
          %s524 = int_to_ptr.vmem [resolvable:$true] %s523
          %529 = dma.hbm_to_vmem [thread:$0]  %s8, 1024, %s524, [#allocation17], 64, 64, 4
        $region40: #{tpu_custom_call.1} parent=11 // pred_fallthru
          _
        // Predicated region
        $region41: #{tpu_custom_call.1} parent=11 // pred_check
          %p530 = pneg %p272
        $region42: #{tpu_custom_call.1} parent=11 // pred_check_branch
          %532 = sbr.rel (%p530) target = $region44
        $region43: #{tpu_custom_call.1} parent=11 // pred_region
          %s534 = ssub.s32 16, 16
          %535 = vsyncadd [#allocation20], %s534
          %s537 = sshll.u32 [#allocation19], 4
          %s538 = int_to_ptr.vmem [resolvable:$true] %s537
          %540 = dma.hbm_to_vmem [thread:$0]  %s9, 16, %s538, [#allocation20]
        $region44: #{tpu_custom_call.1} parent=11 // pred_fallthru
          _
        // Predicated region
        $region45: #{tpu_custom_call.1} parent=11 // pred_check
          %p541 = pneg %p293
        $region46: #{tpu_custom_call.1} parent=11 // pred_check_branch
          %543 = sbr.rel (%p541) target = $region48
        $region47: #{tpu_custom_call.1} parent=11 // pred_region
          %s545 = ssub.s32 16, 16
          %546 = vsyncadd [#allocation20], %s545
          %s548 = sshll.u32 [#allocation21], 4
          %s549 = int_to_ptr.vmem [resolvable:$true] %s548
          %551 = dma.hbm_to_vmem [thread:$0]  %s10, 16, %s549, [#allocation20]
        $region48: #{tpu_custom_call.1} parent=11 // pred_fallthru
          _
        // Predicated region
        $region49: #{tpu_custom_call.1} parent=11 // pred_check
          %p552 = pneg %p314
        $region50: #{tpu_custom_call.1} parent=11 // pred_check_branch
          %554 = sbr.rel (%p552) target = $region52
        $region51: #{tpu_custom_call.1} parent=11 // pred_region
          %s556 = ssub.s32 16, 16
          %557 = vsyncadd [#allocation23], %s556
          %s559 = sshll.u32 [#allocation22], 4
          %s560 = int_to_ptr.vmem [resolvable:$true] %s559
          %562 = dma.hbm_to_vmem [thread:$0]  %s11, 16, %s560, [#allocation23]
        $region52: #{tpu_custom_call.1} parent=11 // pred_fallthru
          _
        // Predicated region
        $region53: #{tpu_custom_call.1} parent=11 // pred_check
          %p563 = pneg %p335
        $region54: #{tpu_custom_call.1} parent=11 // pred_check_branch
          %565 = sbr.rel (%p563) target = $region56
        $region55: #{tpu_custom_call.1} parent=11 // pred_region
          %s567 = ssub.s32 16, 16
          %568 = vsyncadd [#allocation23], %s567
          %s570 = sshll.u32 [#allocation24], 4
          %s571 = int_to_ptr.vmem [resolvable:$true] %s570
          %573 = dma.hbm_to_vmem [thread:$0]  %s12, 16, %s571, [#allocation23]
        $region56: #{tpu_custom_call.1} parent=11 // pred_fallthru
          _
        // Predicated region
        $region57: #{tpu_custom_call.1} parent=11 // pred_check
          %p574 = pneg %p356
        $region58: #{tpu_custom_call.1} parent=11 // pred_check_branch
          %576 = sbr.rel (%p574) target = $region60
        $region59: #{tpu_custom_call.1} parent=11 // pred_region
          %s578 = ssub.s32 16, 16
          %579 = vsyncadd [#allocation26], %s578
          %s581 = sshll.u32 [#allocation25], 4
          %s582 = int_to_ptr.vmem [resolvable:$true] %s581
          %584 = dma.hbm_to_vmem [thread:$0]  %s13, 16, %s582, [#allocation26]
        $region60: #{tpu_custom_call.1} parent=11 // pred_fallthru
          _
        // Predicated region
        $region61: #{tpu_custom_call.1} parent=11 // pred_check
          %p585 = pneg %p377
        $region62: #{tpu_custom_call.1} parent=11 // pred_check_branch
          %587 = sbr.rel (%p585) target = $region64
        $region63: #{tpu_custom_call.1} parent=11 // pred_region
          %s589 = ssub.s32 16, 16
          %590 = vsyncadd [#allocation26], %s589
          %s592 = sshll.u32 [#allocation27], 4
          %s593 = int_to_ptr.vmem [resolvable:$true] %s592
          %595 = dma.hbm_to_vmem [thread:$0]  %s14, 16, %s593, [#allocation26]
        $region64: #{tpu_custom_call.1} parent=11 // pred_fallthru
          _
        // Predicated region
        $region65: #{tpu_custom_call.1} parent=11 // pred_check
          %p596 = pneg %p398
        $region66: #{tpu_custom_call.1} parent=11 // pred_check_branch
          %598 = sbr.rel (%p596) target = $region68
        $region67: #{tpu_custom_call.1} parent=11 // pred_region
          %s600 = ssub.s32 16, 16
          %601 = vsyncadd [#allocation29], %s600
          %s603 = sshll.u32 [#allocation28], 4
          %s604 = int_to_ptr.vmem [resolvable:$true] %s603
          %606 = dma.hbm_to_vmem [thread:$0]  %s15, 16, %s604, [#allocation29]
        $region68: #{tpu_custom_call.1} parent=11 // pred_fallthru
          _
      $region12: #{tpu_custom_call.1} parent=5 // pred_fallthru
        _
      %p607 = scmp.lt.s32.totalorder %s38, 2
      // Predicated region
      $region69: #{tpu_custom_call.1} parent=5 // pred_check
        %p608 = pneg %p607
      $region70: #{tpu_custom_call.1} parent=5 // pred_check_branch
        %610 = sbr.rel (%p608) target = $region72
      $region71: #{tpu_custom_call.1} parent=5 // pred_region
        // Predicated region
        $region73: #{tpu_custom_call.1} parent=71 // pred_check
          %p611 = pneg %p72
        $region74: #{tpu_custom_call.1} parent=71 // pred_check_branch
          %613 = sbr.rel (%p611) target = $region76
        $region75: #{tpu_custom_call.1} parent=71 // pred_region
          %s614 = sand.u32 %s62, 1
          %s615 = scalar_lea.sflag [#allocation5], %s614
          %s616 = sand.u32 %s62, 1
          %s617 = smul.addr %s616, 8
          %s618 = scalar_lea.vmem [#allocation4], %s617
          %s620 = ssub.s32 128, 128
          %621 = vsyncadd %s615, %s620
          %s622 = sadd.s32 %s46, %s45
          %s623 = smul.addr %s622, 128
          %s624 = scalar_lea.hbm %s0, %s623
          %s626 = sshll.u32 %s618, 4
          %s627 = int_to_ptr.vmem [resolvable:$true] %s626
          %629 = dma.hbm_to_vmem [thread:$0]  %s624, 128, %s627, %s615
        $region76: #{tpu_custom_call.1} parent=71 // pred_fallthru
          _
        // Predicated region
        $region77: #{tpu_custom_call.1} parent=71 // pred_check
          %p630 = pneg %p98
        $region78: #{tpu_custom_call.1} parent=71 // pred_check_branch
          %632 = sbr.rel (%p630) target = $region80
        $region79: #{tpu_custom_call.1} parent=71 // pred_region
          %s633 = sand.u32 %s38, 1
          %s634 = scalar_lea.sflag [#allocation8], %s633
          %s635 = sand.u32 %s88, 1
          %s636 = smul.addr %s635, 8
          %s637 = scalar_lea.vmem [#allocation7], %s636
          %s639 = ssub.s32 128, 128
          %640 = vsyncadd %s634, %s639
          %s641 = smul.addr %s45, 128
          %s642 = scalar_lea.hbm %s1, %s641
          %s644 = sshll.u32 %s637, 4
          %s645 = int_to_ptr.vmem [resolvable:$true] %s644
          %647 = dma.hbm_to_vmem [thread:$0]  %s642, 128, %s645, %s634
        $region80: #{tpu_custom_call.1} parent=71 // pred_fallthru
          _
      $region72: #{tpu_custom_call.1} parent=5 // pred_fallthru
        _
      %p648 = scmp.le.s32.totalorder 1, %s38
      %p649 = scmp.lt.s32.totalorder %s38, 3
      %p650 = pnand %p648, %p649
      %p651 = pneg %p650
      // Predicated region
      $region81: #{tpu_custom_call.1} parent=5 // pred_check
        _
      $region82: #{tpu_custom_call.1} parent=5 // pred_check_branch
        %653 = sbr.rel (%p650) target = $region84
      $region83: #{tpu_custom_call.1} parent=5 // pred_region
        %s654 = ssub.s32 %s38, 1
        %s655 = sand.u32 %s65, 1
        %s656 = scalar_lea.sflag [#allocation5], %s655
        %s657 = sand.u32 %s65, 1
        %s658 = smul.addr %s657, 8
        %s659 = scalar_lea.vmem [#allocation4], %s658
        // Predicated region
        $region85: #{tpu_custom_call.1} parent=83 // pred_check
          %p660 = pneg %p78
        $region86: #{tpu_custom_call.1} parent=83 // pred_check_branch
          %662 = sbr.rel (%p660) target = $region88
        $region87: #{tpu_custom_call.1} parent=83 // pred_region
          %663 = dma.done %s656, 128
        $region88: #{tpu_custom_call.1} parent=83 // pred_fallthru
          _
        %s664 = sand.u32 %s43, 1
        %s665 = scalar_lea.sflag [#allocation8], %s664
        %s666 = sand.u32 %s91, 1
        %s667 = smul.addr %s666, 8
        %s668 = scalar_lea.vmem [#allocation7], %s667
        // Predicated region
        $region89: #{tpu_custom_call.1} parent=83 // pred_check
          %p669 = pneg %p104
        $region90: #{tpu_custom_call.1} parent=83 // pred_check_branch
          %671 = sbr.rel (%p669) target = $region92
        $region91: #{tpu_custom_call.1} parent=83 // pred_region
          %672 = dma.done %s665, 128
        $region92: #{tpu_custom_call.1} parent=83 // pred_fallthru
          _
        // Predicated region
        $region93: #{tpu_custom_call.1} parent=83 // pred_check
          %p673 = pneg %p125
        $region94: #{tpu_custom_call.1} parent=83 // pred_check_branch
          %675 = sbr.rel (%p673) target = $region96
        $region95: #{tpu_custom_call.1} parent=83 // pred_region
          %676 = dma.done [#allocation8], 256
        $region96: #{tpu_custom_call.1} parent=83 // pred_fallthru
          _
        // Predicated region
        $region97: #{tpu_custom_call.1} parent=83 // pred_check
          %p677 = pneg %p146
        $region98: #{tpu_custom_call.1} parent=83 // pred_check_branch
          %679 = sbr.rel (%p677) target = $region100
        $region99: #{tpu_custom_call.1} parent=83 // pred_region
          %680 = dma.done [#allocation11], 256
        $region100: #{tpu_custom_call.1} parent=83 // pred_fallthru
          _
        // Predicated region
        $region101: #{tpu_custom_call.1} parent=83 // pred_check
          %p681 = pneg %p167
        $region102: #{tpu_custom_call.1} parent=83 // pred_check_branch
          %683 = sbr.rel (%p681) target = $region104
        $region103: #{tpu_custom_call.1} parent=83 // pred_region
          %684 = dma.done [#allocation11], 256
        $region104: #{tpu_custom_call.1} parent=83 // pred_fallthru
          _
        // Predicated region
        $region105: #{tpu_custom_call.1} parent=83 // pred_check
          %p685 = pneg %p188
        $region106: #{tpu_custom_call.1} parent=83 // pred_check_branch
          %687 = sbr.rel (%p685) target = $region108
        $region107: #{tpu_custom_call.1} parent=83 // pred_region
          %688 = dma.done [#allocation14], 256
        $region108: #{tpu_custom_call.1} parent=83 // pred_fallthru
          _
        // Predicated region
        $region109: #{tpu_custom_call.1} parent=83 // pred_check
          %p689 = pneg %p209
        $region110: #{tpu_custom_call.1} parent=83 // pred_check_branch
          %691 = sbr.rel (%p689) target = $region112
        $region111: #{tpu_custom_call.1} parent=83 // pred_region
          %692 = dma.done [#allocation14], 256
        $region112: #{tpu_custom_call.1} parent=83 // pred_fallthru
          _
        // Predicated region
        $region113: #{tpu_custom_call.1} parent=83 // pred_check
          %p693 = pneg %p230
        $region114: #{tpu_custom_call.1} parent=83 // pred_check_branch
          %695 = sbr.rel (%p693) target = $region116
        $region115: #{tpu_custom_call.1} parent=83 // pred_region
          %696 = dma.done [#allocation17], 16
        $region116: #{tpu_custom_call.1} parent=83 // pred_fallthru
          _
        // Predicated region
        $region117: #{tpu_custom_call.1} parent=83 // pred_check
          %p697 = pneg %p251
        $region118: #{tpu_custom_call.1} parent=83 // pred_check_branch
          %699 = sbr.rel (%p697) target = $region120
        $region119: #{tpu_custom_call.1} parent=83 // pred_region
          %700 = dma.done [#allocation17], 1024
        $region120: #{tpu_custom_call.1} parent=83 // pred_fallthru
          _
        // Predicated region
        $region121: #{tpu_custom_call.1} parent=83 // pred_check
          %p701 = pneg %p272
        $region122: #{tpu_custom_call.1} parent=83 // pred_check_branch
          %703 = sbr.rel (%p701) target = $region124
        $region123: #{tpu_custom_call.1} parent=83 // pred_region
          %704 = dma.done [#allocation20], 16
        $region124: #{tpu_custom_call.1} parent=83 // pred_fallthru
          _
        // Predicated region
        $region125: #{tpu_custom_call.1} parent=83 // pred_check
          %p705 = pneg %p293
        $region126: #{tpu_custom_call.1} parent=83 // pred_check_branch
          %707 = sbr.rel (%p705) target = $region128
        $region127: #{tpu_custom_call.1} parent=83 // pred_region
          %708 = dma.done [#allocation20], 16
        $region128: #{tpu_custom_call.1} parent=83 // pred_fallthru
          _
        // Predicated region
        $region129: #{tpu_custom_call.1} parent=83 // pred_check
          %p709 = pneg %p314
        $region130: #{tpu_custom_call.1} parent=83 // pred_check_branch
          %711 = sbr.rel (%p709) target = $region132
        $region131: #{tpu_custom_call.1} parent=83 // pred_region
          %712 = dma.done [#allocation23], 16
        $region132: #{tpu_custom_call.1} parent=83 // pred_fallthru
          _
        // Predicated region
        $region133: #{tpu_custom_call.1} parent=83 // pred_check
          %p713 = pneg %p335
        $region134: #{tpu_custom_call.1} parent=83 // pred_check_branch
          %715 = sbr.rel (%p713) target = $region136
        $region135: #{tpu_custom_call.1} parent=83 // pred_region
          %716 = dma.done [#allocation23], 16
        $region136: #{tpu_custom_call.1} parent=83 // pred_fallthru
          _
        // Predicated region
        $region137: #{tpu_custom_call.1} parent=83 // pred_check
          %p717 = pneg %p356
        $region138: #{tpu_custom_call.1} parent=83 // pred_check_branch
          %719 = sbr.rel (%p717) target = $region140
        $region139: #{tpu_custom_call.1} parent=83 // pred_region
          %720 = dma.done [#allocation26], 16
        $region140: #{tpu_custom_call.1} parent=83 // pred_fallthru
          _
        // Predicated region
        $region141: #{tpu_custom_call.1} parent=83 // pred_check
          %p721 = pneg %p377
        $region142: #{tpu_custom_call.1} parent=83 // pred_check_branch
          %723 = sbr.rel (%p721) target = $region144
        $region143: #{tpu_custom_call.1} parent=83 // pred_region
          %724 = dma.done [#allocation26], 16
        $region144: #{tpu_custom_call.1} parent=83 // pred_fallthru
          _
        // Predicated region
        $region145: #{tpu_custom_call.1} parent=83 // pred_check
          %p725 = pneg %p398
        $region146: #{tpu_custom_call.1} parent=83 // pred_check_branch
          %727 = sbr.rel (%p725) target = $region148
        $region147: #{tpu_custom_call.1} parent=83 // pred_region
          %728 = dma.done [#allocation29], 16
        $region148: #{tpu_custom_call.1} parent=83 // pred_fallthru
          _
        %s729 = sand.u32 %s65, 1
        %s730 = scalar_lea.sflag [#allocation5], %s729
        %s731 = sand.u32 %s65, 1
        %s732 = smul.addr %s731, 8
        %s733 = scalar_lea.vmem [#allocation4], %s732
        %p734 = pneg %p78
        %p735 = pneg %p75
        %s736 = sand.u32 %s43, 1
        %s737 = scalar_lea.sflag [#allocation8], %s736
        %s738 = sand.u32 %s91, 1
        %s739 = smul.addr %s738, 8
        %s740 = scalar_lea.vmem [#allocation7], %s739
        %p741 = pneg %p104
        %p742 = pneg %p101
        %p743 = pneg %p125
        %p744 = pneg %p122
        %p745 = pneg %p146
        %p746 = pneg %p143
        %p747 = pneg %p167
        %p748 = pneg %p164
        %p749 = pneg %p188
        %p750 = pneg %p185
        %p751 = pneg %p209
        %p752 = pneg %p206
        %p753 = pneg %p230
        %p754 = pneg %p227
        %p755 = pneg %p251
        %p756 = pneg %p248
        %p757 = pneg %p272
        %p758 = pneg %p269
        %p759 = pneg %p293
        %p760 = pneg %p290
        %p761 = pneg %p314
        %p762 = pneg %p311
        %p763 = pneg %p335
        %p764 = pneg %p332
        %p765 = pneg %p356
        %p766 = pneg %p353
        %p767 = pneg %p377
        %p768 = pneg %p374
        %p769 = pneg %p398
        %p770 = pneg %p395
        %p771 = pneg %p426
        %p772 = pneg %p423
        %s773 = sand.u32 %s413, 1
        %s774 = scalar_lea.sflag [#allocation6], %s773
        %s775 = sand.u32 %s413, 1
        %s776 = smul.addr %s775, 8
        %s777 = scalar_lea.vmem [#allocation30], %s776
        %v779 = vld [vmem:[#allocation21] sm:$0x1]
        %v780 = vld [vmem:[#allocation22] sm:$0x1]
        %v781 = vld [vmem:[#allocation24] sm:$0x1]
        %v782 = vld [vmem:[#allocation25] sm:$0x1]
        %v783 = vld [vmem:[#allocation27] sm:$0x1]
        %v784 = vld [vmem:[#allocation28] sm:$0x1]
        %p785 = scmp.eq.s32.totalorder %s48, 0
        // Predicated region
        $region149: #{tpu_custom_call.1} parent=83 // pred_check
          %p786 = pneg %p785
        $region150: #{tpu_custom_call.1} parent=83 // pred_check_branch
          %788 = sbr.rel (%p786) target = $region152
        $region151: #{tpu_custom_call.1} parent=83 // pred_region
          %v789 = vld [vmem:[%s668] sm:$0xff]
          %vm790 = vcmask 261120
          %v791 = vsel %vm790, %v789, 0.0
          %792 = vadd.xlane.f32.xlu0 %v791
          %v793 = vpop.xlane.xlu0 %792
          %v794 = vrcp.pop 32.0
          %v795 = vmul.f32 %v793, %v794
          %v796 = vsub.f32 %v789, %v795
          %v797 = vmul.f32 %v796, %v796
          %v798 = vsel %vm790, %v797, 0.0
          %799 = vadd.xlane.f32.xlu0 %v798
          %v800 = vpop.xlane.xlu0 %799
          %v801 = vmul.f32 %v800, %v794
          %v802 = vadd.f32 %v801, 1e-05
          %v803 = vrsqrt.pop %v802
          %v804 = vmul.f32 %v796, %v803
          %v806 = vlaneseq
          %v807 = vshrl.u32 %v806, 7
          %v808 = vsub.s32 0, %v807
          %v809 = vrot.slane %v781, %v808
          %v811 = vmul.f32 %v804, %v809
          %v813 = vlaneseq
          %v814 = vshrl.u32 %v813, 7
          %v815 = vsub.s32 0, %v814
          %v816 = vrot.slane %v782, %v815
          %v818 = vadd.f32 %v811, %v816
          %v819 = vpack.c.bf16 %v818, %v818
          %v820 = vld [vmem:[#allocation10] sm:$0xf]
          %v821 = vld [vmem:[#allocation10 + $0x4] sm:$0xf]
          %v822 = vld [vmem:[#allocation10 + $0x8] sm:$0xf]
          %v823 = vld [vmem:[#allocation10 + $0xc] sm:$0xf]
          %v828 = vunpack.c.l.b16 %v820
          %v829 = vunpack.c.l.b16 %v821
          %v830 = vunpack.c.l.b16 %v822
          %v831 = vunpack.c.l.b16 %v823
          %v832 = vpack.c.b16 %v829, %v828
          %v833 = vpack.c.b16 %v831, %v830
          %v837 = vsel %vm790, %v819, 0
          %839 = vmatprep.subr.bf16.mxu0 0
          %840 = vmatpush1.bf16.msra.mxu0 %v832
          %841 = vmatprep.subr.bf16.mxu0 0
          %842 = vmatpush1.bf16.msra.mxu0 %v833
          %843 = vmatprep.subr.bf16.mxu0 0
          %844 = vmatpush1.bf16.msra.mxu0 0
          %845 = vmatprep.subr.bf16.mxu0 0
          %846 = vmatpush1.bf16.msra.mxu0 0
          %847 = vmatprep.subr.bf16.mxu0 0
          %848 = vmatpush1.bf16.msra.mxu0 0
          %849 = vmatprep.subr.bf16.mxu0 0
          %850 = vmatpush1.bf16.msra.mxu0 0
          %851 = vmatprep.subr.bf16.mxu0 0
          %852 = vmatpush1.bf16.msra.mxu0 0
          %853 = vmatprep.subr.bf16.mxu0 0
          %854 = vmatpush1.bf16.msra.mxu0 0
          %855 = vmatprep.subr.bf16.mxu0 0
          %856 = vmatpush1.bf16.msra.mxu0 0
          %857 = vmatprep.subr.bf16.mxu0 0
          %858 = vmatpush1.bf16.msra.mxu0 0
          %859 = vmatprep.subr.bf16.mxu0 0
          %860 = vmatpush1.bf16.msra.mxu0 0
          %861 = vmatprep.subr.bf16.mxu0 0
          %862 = vmatpush1.bf16.msra.mxu0 0
          %863 = vmatprep.subr.bf16.mxu0 0
          %864 = vmatpush1.bf16.msra.mxu0 0
          %865 = vmatprep.subr.bf16.mxu0 0
          %866 = vmatpush1.bf16.msra.mxu0 0
          %867 = vmatprep.subr.bf16.mxu0 0
          %868 = vmatpush1.bf16.msra.mxu0 0
          %869 = vmatprep.subr.bf16.mxu0 0
          %870 = vmatpush1.bf16.msra.mxu0 0
          %871 = vmatprep.mubr.bf16.mxu0 0
          %872 = vmatmul.mubr.bf16.gmra.mrb[0].mxu0 %v837
          %v873 = vpop.f32.mrb[0].mxu0
          %v874 = vadd.f32 0.0, %v873
          %v875 = vpop.f32.mrb[0].mxu0
          %v876 = vpop.f32.mrb[0].mxu0
          %v877 = vpop.f32.mrb[0].mxu0
          %878 = vdwg.mxu0
          %v879 = vpack.c.bf16 %v874, %v874
          %vm880 = vcmask 257024
          %881 = vst.msk [vmem:[#allocation2] sm:$0xf] %vm880, %v879
          %v882 = vld [vmem:[#allocation12] sm:$0xf]
          %v883 = vld [vmem:[#allocation12 + $0x4] sm:$0xf]
          %v884 = vld [vmem:[#allocation12 + $0x8] sm:$0xf]
          %v885 = vld [vmem:[#allocation12 + $0xc] sm:$0xf]
          %v890 = vunpack.c.l.b16 %v882
          %v891 = vunpack.c.l.b16 %v883
          %v892 = vunpack.c.l.b16 %v884
          %v893 = vunpack.c.l.b16 %v885
          %v894 = vpack.c.b16 %v891, %v890
          %v895 = vpack.c.b16 %v893, %v892
          %898 = vmatprep.subr.bf16.mxu0 0
          %899 = vmatpush1.bf16.msra.mxu0 %v894
          %900 = vmatprep.subr.bf16.mxu0 0
          %901 = vmatpush1.bf16.msra.mxu0 %v895
          %902 = vmatprep.subr.bf16.mxu0 0
          %903 = vmatpush1.bf16.msra.mxu0 0
          %904 = vmatprep.subr.bf16.mxu0 0
          %905 = vmatpush1.bf16.msra.mxu0 0
          %906 = vmatprep.subr.bf16.mxu0 0
          %907 = vmatpush1.bf16.msra.mxu0 0
          %908 = vmatprep.subr.bf16.mxu0 0
          %909 = vmatpush1.bf16.msra.mxu0 0
          %910 = vmatprep.subr.bf16.mxu0 0
          %911 = vmatpush1.bf16.msra.mxu0 0
          %912 = vmatprep.subr.bf16.mxu0 0
          %913 = vmatpush1.bf16.msra.mxu0 0
          %914 = vmatprep.subr.bf16.mxu0 0
          %915 = vmatpush1.bf16.msra.mxu0 0
          %916 = vmatprep.subr.bf16.mxu0 0
          %917 = vmatpush1.bf16.msra.mxu0 0
          %918 = vmatprep.subr.bf16.mxu0 0
          %919 = vmatpush1.bf16.msra.mxu0 0
          %920 = vmatprep.subr.bf16.mxu0 0
          %921 = vmatpush1.bf16.msra.mxu0 0
          %922 = vmatprep.subr.bf16.mxu0 0
          %923 = vmatpush1.bf16.msra.mxu0 0
          %924 = vmatprep.subr.bf16.mxu0 0
          %925 = vmatpush1.bf16.msra.mxu0 0
          %926 = vmatprep.subr.bf16.mxu0 0
          %927 = vmatpush1.bf16.msra.mxu0 0
          %928 = vmatprep.subr.bf16.mxu0 0
          %929 = vmatpush1.bf16.msra.mxu0 0
          %930 = vmatprep.mubr.bf16.mxu0 0
          %931 = vmatmul.mubr.bf16.gmra.mrb[0].mxu0 %v837
          %v932 = vpop.f32.mrb[0].mxu0
          %v933 = vadd.f32 0.0, %v932
          %v934 = vpop.f32.mrb[0].mxu0
          %v935 = vpop.f32.mrb[0].mxu0
          %v936 = vpop.f32.mrb[0].mxu0
          %937 = vdwg.mxu0
          %v938 = vpack.c.bf16 %v933, %v933
          %939 = vst.msk [vmem:[#allocation3] sm:$0xf] %vm880, %v938
        $region152: #{tpu_custom_call.1} parent=83 // pred_fallthru
          _
        %v940 = vld [vmem:[%s659] sm:$0xff]
        %vm941 = vcmask 261120
        %v942 = vsel %vm941, %v940, 0.0
        %943 = vadd.xlane.f32.xlu0 %v942
        %v944 = vpop.xlane.xlu0 %943
        %v945 = vrcp.pop 32.0
        %v946 = vmul.f32 %v944, %v945
        %v947 = vsub.f32 %v940, %v946
        %v948 = vmul.f32 %v947, %v947
        %v949 = vsel %vm941, %v948, 0.0
        %950 = vadd.xlane.f32.xlu0 %v949
        %v951 = vpop.xlane.xlu0 %950
        %v952 = vmul.f32 %v951, %v945
        %v953 = vadd.f32 %v952, 1e-05
        %v954 = vrsqrt.pop %v953
        %v955 = vmul.f32 %v947, %v954
        %v957 = vlaneseq
        %v958 = vshrl.u32 %v957, 7
        %v959 = vsub.s32 0, %v958
        %v960 = vrot.slane %v779, %v959
        %v962 = vmul.f32 %v955, %v960
        %v964 = vlaneseq
        %v965 = vshrl.u32 %v964, 7
        %v966 = vsub.s32 0, %v965
        %v967 = vrot.slane %v780, %v966
        %v969 = vadd.f32 %v962, %v967
        %v970 = vsel %vm941, %v969, 0.0
        %971 = vadd.xlane.f32.xlu0 %v970
        %v972 = vpop.xlane.xlu0 %971
        %v973 = vmul.f32 %v972, %v945
        %v974 = vsub.f32 %v969, %v973
        %v975 = vmul.f32 %v974, %v974
        %v976 = vsel %vm941, %v975, 0.0
        %977 = vadd.xlane.f32.xlu0 %v976
        %v978 = vpop.xlane.xlu0 %977
        %v979 = vmul.f32 %v978, %v945
        %v980 = vadd.f32 %v979, 1e-05
        %v981 = vrsqrt.pop %v980
        %v982 = vmul.f32 %v974, %v981
        %v984 = vlaneseq
        %v985 = vshrl.u32 %v984, 7
        %v986 = vsub.s32 0, %v985
        %v987 = vrot.slane %v781, %v986
        %v989 = vmul.f32 %v982, %v987
        %v991 = vlaneseq
        %v992 = vshrl.u32 %v991, 7
        %v993 = vsub.s32 0, %v992
        %v994 = vrot.slane %v782, %v993
        %v996 = vadd.f32 %v989, %v994
        %v997 = vpack.c.bf16 %v996, %v996
        %v998 = vld [vmem:[#allocation9] sm:$0xf]
        %v999 = vld [vmem:[#allocation9 + $0x4] sm:$0xf]
        %v1000 = vld [vmem:[#allocation9 + $0x8] sm:$0xf]
        %v1001 = vld [vmem:[#allocation9 + $0xc] sm:$0xf]
        %v1006 = vunpack.c.l.b16 %v998
        %v1007 = vunpack.c.l.b16 %v999
        %v1008 = vunpack.c.l.b16 %v1000
        %v1009 = vunpack.c.l.b16 %v1001
        %v1010 = vpack.c.b16 %v1007, %v1006
        %v1011 = vpack.c.b16 %v1009, %v1008
        %v1015 = vsel %vm941, %v997, 0
        %1017 = vmatprep.subr.bf16.mxu0 0
        %1018 = vmatpush1.bf16.msra.mxu0 %v1010
        %1019 = vmatprep.subr.bf16.mxu0 0
        %1020 = vmatpush1.bf16.msra.mxu0 %v1011
        %1021 = vmatprep.subr.bf16.mxu0 0
        %1022 = vmatpush1.bf16.msra.mxu0 0
        %1023 = vmatprep.subr.bf16.mxu0 0
        %1024 = vmatpush1.bf16.msra.mxu0 0
        %1025 = vmatprep.subr.bf16.mxu0 0
        %1026 = vmatpush1.bf16.msra.mxu0 0
        %1027 = vmatprep.subr.bf16.mxu0 0
        %1028 = vmatpush1.bf16.msra.mxu0 0
        %1029 = vmatprep.subr.bf16.mxu0 0
        %1030 = vmatpush1.bf16.msra.mxu0 0
        %1031 = vmatprep.subr.bf16.mxu0 0
        %1032 = vmatpush1.bf16.msra.mxu0 0
        %1033 = vmatprep.subr.bf16.mxu0 0
        %1034 = vmatpush1.bf16.msra.mxu0 0
        %1035 = vmatprep.subr.bf16.mxu0 0
        %1036 = vmatpush1.bf16.msra.mxu0 0
        %1037 = vmatprep.subr.bf16.mxu0 0
        %1038 = vmatpush1.bf16.msra.mxu0 0
        %1039 = vmatprep.subr.bf16.mxu0 0
        %1040 = vmatpush1.bf16.msra.mxu0 0
        %1041 = vmatprep.subr.bf16.mxu0 0
        %1042 = vmatpush1.bf16.msra.mxu0 0
        %1043 = vmatprep.subr.bf16.mxu0 0
        %1044 = vmatpush1.bf16.msra.mxu0 0
        %1045 = vmatprep.subr.bf16.mxu0 0
        %1046 = vmatpush1.bf16.msra.mxu0 0
        %1047 = vmatprep.subr.bf16.mxu0 0
        %1048 = vmatpush1.bf16.msra.mxu0 0
        %1049 = vmatprep.mubr.bf16.mxu0 0
        %1050 = vmatmul.mubr.bf16.gmra.mrb[0].mxu0 %v1015
        %v1051 = vpop.f32.mrb[0].mxu0
        %v1052 = vadd.f32 0.0, %v1051
        %v1053 = vpop.f32.mrb[0].mxu0
        %v1054 = vpop.f32.mrb[0].mxu0
        %v1055 = vpop.f32.mrb[0].mxu0
        %1056 = vdwg.mxu0
        %v1057 = vmul.f32 %v1052, 0.35355338
        %v1058 = vpack.c.bf16 %v1057, %v1057
        %v1059 = vld [vmem:[#allocation2] sm:$0xf]
        %v1060 = vld [vmem:[#allocation3] sm:$0xf]
        %vm1061 = vcmask 64512
        %v1063 = vsel %vm1061, %v1058, 0
        %v1066 = vsel %vm1061, %v1059, 0
        %1068 = vmatprep.subr.bf16.mxu0 0
        %1069 = vmatpush1.bf16.xpose.msra.mxu0 %v1066
        %1070 = vmatprep.subr.bf16.mxu0 0
        %1071 = vmatpush1.bf16.xpose.msra.mxu0 0
        %1072 = vmatprep.subr.bf16.mxu0 0
        %1073 = vmatpush1.bf16.xpose.msra.mxu0 0
        %1074 = vmatprep.subr.bf16.mxu0 0
        %1075 = vmatpush1.bf16.xpose.msra.mxu0 0
        %1076 = vmatprep.subr.bf16.mxu0 0
        %1077 = vmatpush1.bf16.xpose.msra.mxu0 0
        %1078 = vmatprep.subr.bf16.mxu0 0
        %1079 = vmatpush1.bf16.xpose.msra.mxu0 0
        %1080 = vmatprep.subr.bf16.mxu0 0
        %1081 = vmatpush1.bf16.xpose.msra.mxu0 0
        %1082 = vmatprep.subr.bf16.mxu0 0
        %1083 = vmatpush1.bf16.xpose.msra.mxu0 0
        %1084 = vmatprep.subr.bf16.mxu0 0
        %1085 = vmatpush1.bf16.xpose.msra.mxu0 0
        %1086 = vmatprep.subr.bf16.mxu0 0
        %1087 = vmatpush1.bf16.xpose.msra.mxu0 0
        %1088 = vmatprep.subr.bf16.mxu0 0
        %1089 = vmatpush1.bf16.xpose.msra.mxu0 0
        %1090 = vmatprep.subr.bf16.mxu0 0
        %1091 = vmatpush1.bf16.xpose.msra.mxu0 0
        %1092 = vmatprep.subr.bf16.mxu0 0
        %1093 = vmatpush1.bf16.xpose.msra.mxu0 0
        %1094 = vmatprep.subr.bf16.mxu0 0
        %1095 = vmatpush1.bf16.xpose.msra.mxu0 0
        %1096 = vmatprep.subr.bf16.mxu0 0
        %1097 = vmatpush1.bf16.xpose.msra.mxu0 0
        %1098 = vmatprep.subr.bf16.mxu0 0
        %1099 = vmatpush1.bf16.xpose.msra.mxu0 0
        %1100 = vmatprep.mubr.bf16.mxu0 0
        %1101 = vmatmul.mubr.bf16.gmra.mrb[0].mxu0 %v1063
        %v1102 = vpop.f32.mrb[0].mxu0
        %v1103 = vadd.f32 0.0, %v1102
        %v1104 = vpop.f32.mrb[0].mxu0
        %v1105 = vpop.f32.mrb[0].mxu0
        %v1106 = vpop.f32.mrb[0].mxu0
        %1107 = vdwg.mxu0
        %v1108 = vsel %vm1061, %v1103, -inf
        %1109 = vmax.xlane.f32.xlu0 %v1108
        %v1110 = vpop.xlane.xlu0 %1109
        %v1111 = vsub.f32 %v1103, %v1110
        %v1112 = vmul.f32 %v1111, 1.442695
        %v1113 = vpow.pop %v1112
        %v1114 = vsel %vm1061, %v1113, 0.0
        %1115 = vadd.xlane.f32.xlu0 %v1114
        %v1116 = vpop.xlane.xlu0 %1115
        %v1117 = vrcp.pop %v1116
        %v1118 = vmul.f32 %v1113, %v1117
        %v1119 = vpack.c.bf16 %v1118, %v1118
        %v1121 = vsel %vm1061, %v1119, 0
        %vm1123 = vcmask 1043456
        %v1125 = vsel %vm1123, %v1060, 0
        %1127 = vmatprep.subr.bf16.mxu0 0
        %1128 = vmatpush1.bf16.msra.mxu0 %v1125
        %1129 = vmatprep.subr.bf16.mxu0 0
        %1130 = vmatpush1.bf16.msra.mxu0 0
        %1131 = vmatprep.subr.bf16.mxu0 0
        %1132 = vmatpush1.bf16.msra.mxu0 0
        %1133 = vmatprep.subr.bf16.mxu0 0
        %1134 = vmatpush1.bf16.msra.mxu0 0
        %1135 = vmatprep.subr.bf16.mxu0 0
        %1136 = vmatpush1.bf16.msra.mxu0 0
        %1137 = vmatprep.subr.bf16.mxu0 0
        %1138 = vmatpush1.bf16.msra.mxu0 0
        %1139 = vmatprep.subr.bf16.mxu0 0
        %1140 = vmatpush1.bf16.msra.mxu0 0
        %1141 = vmatprep.subr.bf16.mxu0 0
        %1142 = vmatpush1.bf16.msra.mxu0 0
        %1143 = vmatprep.subr.bf16.mxu0 0
        %1144 = vmatpush1.bf16.msra.mxu0 0
        %1145 = vmatprep.subr.bf16.mxu0 0
        %1146 = vmatpush1.bf16.msra.mxu0 0
        %1147 = vmatprep.subr.bf16.mxu0 0
        %1148 = vmatpush1.bf16.msra.mxu0 0
        %1149 = vmatprep.subr.bf16.mxu0 0
        %1150 = vmatpush1.bf16.msra.mxu0 0
        %1151 = vmatprep.subr.bf16.mxu0 0
        %1152 = vmatpush1.bf16.msra.mxu0 0
        %1153 = vmatprep.subr.bf16.mxu0 0
        %1154 = vmatpush1.bf16.msra.mxu0 0
        %1155 = vmatprep.subr.bf16.mxu0 0
        %1156 = vmatpush1.bf16.msra.mxu0 0
        %1157 = vmatprep.subr.bf16.mxu0 0
        %1158 = vmatpush1.bf16.msra.mxu0 0
        %1159 = vmatprep.mubr.bf16.mxu0 0
        %1160 = vmatmul.mubr.bf16.gmra.mrb[0].mxu0 %v1121
        %v1161 = vpop.f32.mrb[0].mxu0
        %v1162 = vadd.f32 0.0, %v1161
        %v1163 = vpop.f32.mrb[0].mxu0
        %v1164 = vpop.f32.mrb[0].mxu0
        %v1165 = vpop.f32.mrb[0].mxu0
        %1166 = vdwg.mxu0
        %v1167 = vpack.c.bf16 %v1162, %v1162
        %v1168 = vld [vmem:[#allocation13] sm:$0xf]
        %v1169 = vld [vmem:[#allocation13 + $0x4] sm:$0xf]
        %v1170 = vld [vmem:[#allocation13 + $0x8] sm:$0xf]
        %v1171 = vld [vmem:[#allocation13 + $0xc] sm:$0xf]
        %1173 = vrot.lane.b32.xlu0 %v1058, 120
        %v1174 = vpop.permute.xlu0 %1173
        %v1176 = vunpack.c.l.b16 %v1059
        %v1177 = vpack.c.b16 %v1176, %v1176
        %1178 = vrot.lane.b32.xlu0 %v1177, 120
        %v1179 = vpop.permute.xlu0 %1178
        %v1181 = vsel %vm1061, %v1174, 0
        %v1184 = vsel %vm1061, %v1179, 0
        %1186 = vmatprep.subr.bf16.mxu0 0
        %1187 = vmatpush1.bf16.xpose.msra.mxu0 %v1184
        %1188 = vmatprep.subr.bf16.mxu0 0
        %1189 = vmatpush1.bf16.xpose.msra.mxu0 0
        %1190 = vmatprep.subr.bf16.mxu0 0
        %1191 = vmatpush1.bf16.xpose.msra.mxu0 0
        %1192 = vmatprep.subr.bf16.mxu0 0
        %1193 = vmatpush1.bf16.xpose.msra.mxu0 0
        %1194 = vmatprep.subr.bf16.mxu0 0
        %1195 = vmatpush1.bf16.xpose.msra.mxu0 0
        %1196 = vmatprep.subr.bf16.mxu0 0
        %1197 = vmatpush1.bf16.xpose.msra.mxu0 0
        %1198 = vmatprep.subr.bf16.mxu0 0
        %1199 = vmatpush1.bf16.xpose.msra.mxu0 0
        %1200 = vmatprep.subr.bf16.mxu0 0
        %1201 = vmatpush1.bf16.xpose.msra.mxu0 0
        %1202 = vmatprep.subr.bf16.mxu0 0
        %1203 = vmatpush1.bf16.xpose.msra.mxu0 0
        %1204 = vmatprep.subr.bf16.mxu0 0
        %1205 = vmatpush1.bf16.xpose.msra.mxu0 0
        %1206 = vmatprep.subr.bf16.mxu0 0
        %1207 = vmatpush1.bf16.xpose.msra.mxu0 0
        %1208 = vmatprep.subr.bf16.mxu0 0
        %1209 = vmatpush1.bf16.xpose.msra.mxu0 0
        %1210 = vmatprep.subr.bf16.mxu0 0
        %1211 = vmatpush1.bf16.xpose.msra.mxu0 0
        %1212 = vmatprep.subr.bf16.mxu0 0
        %1213 = vmatpush1.bf16.xpose.msra.mxu0 0
        %1214 = vmatprep.subr.bf16.mxu0 0
        %1215 = vmatpush1.bf16.xpose.msra.mxu0 0
        %1216 = vmatprep.subr.bf16.mxu0 0
        %1217 = vmatpush1.bf16.xpose.msra.mxu0 0
        %1218 = vmatprep.mubr.bf16.mxu0 0
        %1219 = vmatmul.mubr.bf16.gmra.mrb[0].mxu0 %v1181
        %v1220 = vpop.f32.mrb[0].mxu0
        %v1221 = vadd.f32 0.0, %v1220
        %v1222 = vpop.f32.mrb[0].mxu0
        %v1223 = vpop.f32.mrb[0].mxu0
        %v1224 = vpop.f32.mrb[0].mxu0
        %1225 = vdwg.mxu0
        %v1226 = vsel %vm1061, %v1221, -inf
        %1227 = vmax.xlane.f32.xlu0 %v1226
        %v1228 = vpop.xlane.xlu0 %1227
        %v1229 = vsub.f32 %v1221, %v1228
        %v1230 = vmul.f32 %v1229, 1.442695
        %v1231 = vpow.pop %v1230
        %v1232 = vsel %vm1061, %v1231, 0.0
        %1233 = vadd.xlane.f32.xlu0 %v1232
        %v1234 = vpop.xlane.xlu0 %1233
        %v1235 = vrcp.pop %v1234
        %v1236 = vmul.f32 %v1231, %v1235
        %v1237 = vpack.c.bf16 %v1236, %v1236
        %v1239 = vunpack.c.l.b16 %v1060
        %v1240 = vpack.c.b16 %v1239, %v1239
        %1241 = vrot.lane.b32.xlu0 %v1240, 120
        %v1242 = vpop.permute.xlu0 %1241
        %v1244 = vsel %vm1061, %v1237, 0
        %v1247 = vsel %vm1123, %v1242, 0
        %1249 = vmatprep.subr.bf16.mxu0 0
        %1250 = vmatpush1.bf16.msra.mxu0 %v1247
        %1251 = vmatprep.subr.bf16.mxu0 0
        %1252 = vmatpush1.bf16.msra.mxu0 0
        %1253 = vmatprep.subr.bf16.mxu0 0
        %1254 = vmatpush1.bf16.msra.mxu0 0
        %1255 = vmatprep.subr.bf16.mxu0 0
        %1256 = vmatpush1.bf16.msra.mxu0 0
        %1257 = vmatprep.subr.bf16.mxu0 0
        %1258 = vmatpush1.bf16.msra.mxu0 0
        %1259 = vmatprep.subr.bf16.mxu0 0
        %1260 = vmatpush1.bf16.msra.mxu0 0
        %1261 = vmatprep.subr.bf16.mxu0 0
        %1262 = vmatpush1.bf16.msra.mxu0 0
        %1263 = vmatprep.subr.bf16.mxu0 0
        %1264 = vmatpush1.bf16.msra.mxu0 0
        %1265 = vmatprep.subr.bf16.mxu0 0
        %1266 = vmatpush1.bf16.msra.mxu0 0
        %1267 = vmatprep.subr.bf16.mxu0 0
        %1268 = vmatpush1.bf16.msra.mxu0 0
        %1269 = vmatprep.subr.bf16.mxu0 0
        %1270 = vmatpush1.bf16.msra.mxu0 0
        %1271 = vmatprep.subr.bf16.mxu0 0
        %1272 = vmatpush1.bf16.msra.mxu0 0
        %1273 = vmatprep.subr.bf16.mxu0 0
        %1274 = vmatpush1.bf16.msra.mxu0 0
        %1275 = vmatprep.subr.bf16.mxu0 0
        %1276 = vmatpush1.bf16.msra.mxu0 0
        %1277 = vmatprep.subr.bf16.mxu0 0
        %1278 = vmatpush1.bf16.msra.mxu0 0
        %1279 = vmatprep.subr.bf16.mxu0 0
        %1280 = vmatpush1.bf16.msra.mxu0 0
        %1281 = vmatprep.mubr.bf16.mxu0 0
        %1282 = vmatmul.mubr.bf16.gmra.mrb[0].mxu0 %v1244
        %v1283 = vpop.f32.mrb[0].mxu0
        %v1284 = vadd.f32 0.0, %v1283
        %v1285 = vpop.f32.mrb[0].mxu0
        %v1286 = vpop.f32.mrb[0].mxu0
        %v1287 = vpop.f32.mrb[0].mxu0
        %1288 = vdwg.mxu0
        %v1289 = vpack.c.bf16 %v1284, %v1284
        %v1294 = vunpack.c.l.b16 %v1168
        %v1295 = vunpack.c.l.b16 %v1169
        %v1296 = vunpack.c.l.b16 %v1170
        %v1297 = vunpack.c.l.b16 %v1171
        %v1298 = vpack.c.b16 %v1295, %v1294
        %v1299 = vpack.c.b16 %v1297, %v1296
        %1300 = vrot.lane.b32.xlu0 %v1298, 120
        %v1301 = vpop.permute.xlu0 %1300
        %1302 = vrot.lane.b32.xlu0 %v1299, 120
        %v1303 = vpop.permute.xlu0 %1302
        %v1305 = vsel %vm1061, %v1289, 0
        %v1308 = vsel %vm1061, %v1301, 0
        %v1311 = vsel %vm1061, %v1303, 0
        %1313 = vmatprep.subr.bf16.mxu0 0
        %1314 = vmatpush1.bf16.xpose.msra.mxu0 %v1308
        %1315 = vmatprep.subr.bf16.mxu0 0
        %1316 = vmatpush1.bf16.xpose.msra.mxu0 %v1311
        %1317 = vmatprep.subr.bf16.mxu0 0
        %1318 = vmatpush1.bf16.xpose.msra.mxu0 0
        %1319 = vmatprep.subr.bf16.mxu0 0
        %1320 = vmatpush1.bf16.xpose.msra.mxu0 0
        %1321 = vmatprep.subr.bf16.mxu0 0
        %1322 = vmatpush1.bf16.xpose.msra.mxu0 0
        %1323 = vmatprep.subr.bf16.mxu0 0
        %1324 = vmatpush1.bf16.xpose.msra.mxu0 0
        %1325 = vmatprep.subr.bf16.mxu0 0
        %1326 = vmatpush1.bf16.xpose.msra.mxu0 0
        %1327 = vmatprep.subr.bf16.mxu0 0
        %1328 = vmatpush1.bf16.xpose.msra.mxu0 0
        %1329 = vmatprep.subr.bf16.mxu0 0
        %1330 = vmatpush1.bf16.xpose.msra.mxu0 0
        %1331 = vmatprep.subr.bf16.mxu0 0
        %1332 = vmatpush1.bf16.xpose.msra.mxu0 0
        %1333 = vmatprep.subr.bf16.mxu0 0
        %1334 = vmatpush1.bf16.xpose.msra.mxu0 0
        %1335 = vmatprep.subr.bf16.mxu0 0
        %1336 = vmatpush1.bf16.xpose.msra.mxu0 0
        %1337 = vmatprep.subr.bf16.mxu0 0
        %1338 = vmatpush1.bf16.xpose.msra.mxu0 0
        %1339 = vmatprep.subr.bf16.mxu0 0
        %1340 = vmatpush1.bf16.xpose.msra.mxu0 0
        %1341 = vmatprep.subr.bf16.mxu0 0
        %1342 = vmatpush1.bf16.xpose.msra.mxu0 0
        %1343 = vmatprep.subr.bf16.mxu0 0
        %1344 = vmatpush1.bf16.xpose.msra.mxu0 0
        %1345 = vmatprep.mubr.bf16.mxu0 0
        %1346 = vmatmul.mubr.bf16.gmra.mrb[0].mxu0 %v1305
        %v1347 = vpop.f32.mrb[0].mxu0
        %v1348 = vadd.f32 0.0, %v1347
        %v1349 = vpop.f32.mrb[0].mxu0
        %v1350 = vpop.f32.mrb[0].mxu0
        %v1351 = vpop.f32.mrb[0].mxu0
        %1352 = vdwg.mxu0
        %v1354 = vsel %vm1061, %v1167, 0
        %v1357 = vsel %vm1061, %v1298, 0
        %v1360 = vsel %vm1061, %v1299, 0
        %1362 = vmatprep.subr.bf16.mxu0 0
        %1363 = vmatpush1.bf16.xpose.msra.mxu0 %v1357
        %1364 = vmatprep.subr.bf16.mxu0 0
        %1365 = vmatpush1.bf16.xpose.msra.mxu0 %v1360
        %1366 = vmatprep.subr.bf16.mxu0 0
        %1367 = vmatpush1.bf16.xpose.msra.mxu0 0
        %1368 = vmatprep.subr.bf16.mxu0 0
        %1369 = vmatpush1.bf16.xpose.msra.mxu0 0
        %1370 = vmatprep.subr.bf16.mxu0 0
        %1371 = vmatpush1.bf16.xpose.msra.mxu0 0
        %1372 = vmatprep.subr.bf16.mxu0 0
        %1373 = vmatpush1.bf16.xpose.msra.mxu0 0
        %1374 = vmatprep.subr.bf16.mxu0 0
        %1375 = vmatpush1.bf16.xpose.msra.mxu0 0
        %1376 = vmatprep.subr.bf16.mxu0 0
        %1377 = vmatpush1.bf16.xpose.msra.mxu0 0
        %1378 = vmatprep.subr.bf16.mxu0 0
        %1379 = vmatpush1.bf16.xpose.msra.mxu0 0
        %1380 = vmatprep.subr.bf16.mxu0 0
        %1381 = vmatpush1.bf16.xpose.msra.mxu0 0
        %1382 = vmatprep.subr.bf16.mxu0 0
        %1383 = vmatpush1.bf16.xpose.msra.mxu0 0
        %1384 = vmatprep.subr.bf16.mxu0 0
        %1385 = vmatpush1.bf16.xpose.msra.mxu0 0
        %1386 = vmatprep.subr.bf16.mxu0 0
        %1387 = vmatpush1.bf16.xpose.msra.mxu0 0
        %1388 = vmatprep.subr.bf16.mxu0 0
        %1389 = vmatpush1.bf16.xpose.msra.mxu0 0
        %1390 = vmatprep.subr.bf16.mxu0 0
        %1391 = vmatpush1.bf16.xpose.msra.mxu0 0
        %1392 = vmatprep.subr.bf16.mxu0 0
        %1393 = vmatpush1.bf16.xpose.msra.mxu0 0
        %1394 = vmatprep.mubr.bf16.mxu0 0
        %1395 = vmatmul.mubr.bf16.gmra.mrb[0].mxu0 %v1354
        %v1396 = vpop.f32.mrb[0].mxu0
        %v1397 = vadd.f32 %v1348, %v1396
        %v1398 = vpop.f32.mrb[0].mxu0
        %v1399 = vpop.f32.mrb[0].mxu0
        %v1400 = vpop.f32.mrb[0].mxu0
        %1401 = vdwg.mxu0
        %1402 = vrot.lane.b32.xlu0 %v1058, 112
        %v1403 = vpop.permute.xlu0 %1402
        %1404 = vrot.lane.b32.xlu0 %v1177, 112
        %v1405 = vpop.permute.xlu0 %1404
        %v1407 = vsel %vm1061, %v1403, 0
        %v1410 = vsel %vm1061, %v1405, 0
        %1412 = vmatprep.subr.bf16.mxu0 0
        %1413 = vmatpush1.bf16.xpose.msra.mxu0 %v1410
        %1414 = vmatprep.subr.bf16.mxu0 0
        %1415 = vmatpush1.bf16.xpose.msra.mxu0 0
        %1416 = vmatprep.subr.bf16.mxu0 0
        %1417 = vmatpush1.bf16.xpose.msra.mxu0 0
        %1418 = vmatprep.subr.bf16.mxu0 0
        %1419 = vmatpush1.bf16.xpose.msra.mxu0 0
        %1420 = vmatprep.subr.bf16.mxu0 0
        %1421 = vmatpush1.bf16.xpose.msra.mxu0 0
        %1422 = vmatprep.subr.bf16.mxu0 0
        %1423 = vmatpush1.bf16.xpose.msra.mxu0 0
        %1424 = vmatprep.subr.bf16.mxu0 0
        %1425 = vmatpush1.bf16.xpose.msra.mxu0 0
        %1426 = vmatprep.subr.bf16.mxu0 0
        %1427 = vmatpush1.bf16.xpose.msra.mxu0 0
        %1428 = vmatprep.subr.bf16.mxu0 0
        %1429 = vmatpush1.bf16.xpose.msra.mxu0 0
        %1430 = vmatprep.subr.bf16.mxu0 0
        %1431 = vmatpush1.bf16.xpose.msra.mxu0 0
        %1432 = vmatprep.subr.bf16.mxu0 0
        %1433 = vmatpush1.bf16.xpose.msra.mxu0 0
        %1434 = vmatprep.subr.bf16.mxu0 0
        %1435 = vmatpush1.bf16.xpose.msra.mxu0 0
        %1436 = vmatprep.subr.bf16.mxu0 0
        %1437 = vmatpush1.bf16.xpose.msra.mxu0 0
        %1438 = vmatprep.subr.bf16.mxu0 0
        %1439 = vmatpush1.bf16.xpose.msra.mxu0 0
        %1440 = vmatprep.subr.bf16.mxu0 0
        %1441 = vmatpush1.bf16.xpose.msra.mxu0 0
        %1442 = vmatprep.subr.bf16.mxu0 0
        %1443 = vmatpush1.bf16.xpose.msra.mxu0 0
        %1444 = vmatprep.mubr.bf16.mxu0 0
        %1445 = vmatmul.mubr.bf16.gmra.mrb[0].mxu0 %v1407
        %v1446 = vpop.f32.mrb[0].mxu0
        %v1447 = vadd.f32 0.0, %v1446
        %v1448 = vpop.f32.mrb[0].mxu0
        %v1449 = vpop.f32.mrb[0].mxu0
        %v1450 = vpop.f32.mrb[0].mxu0
        %1451 = vdwg.mxu0
        %v1452 = vsel %vm1061, %v1447, -inf
        %1453 = vmax.xlane.f32.xlu0 %v1452
        %v1454 = vpop.xlane.xlu0 %1453
        %v1455 = vsub.f32 %v1447, %v1454
        %v1456 = vmul.f32 %v1455, 1.442695
        %v1457 = vpow.pop %v1456
        %v1458 = vsel %vm1061, %v1457, 0.0
        %1459 = vadd.xlane.f32.xlu0 %v1458
        %v1460 = vpop.xlane.xlu0 %1459
        %v1461 = vrcp.pop %v1460
        %v1462 = vmul.f32 %v1457, %v1461
        %v1463 = vpack.c.bf16 %v1462, %v1462
        %1464 = vrot.lane.b32.xlu0 %v1240, 112
        %v1465 = vpop.permute.xlu0 %1464
        %v1467 = vsel %vm1061, %v1463, 0
        %v1470 = vsel %vm1123, %v1465, 0
        %1472 = vmatprep.subr.bf16.mxu0 0
        %1473 = vmatpush1.bf16.msra.mxu0 %v1470
        %1474 = vmatprep.subr.bf16.mxu0 0
        %1475 = vmatpush1.bf16.msra.mxu0 0
        %1476 = vmatprep.subr.bf16.mxu0 0
        %1477 = vmatpush1.bf16.msra.mxu0 0
        %1478 = vmatprep.subr.bf16.mxu0 0
        %1479 = vmatpush1.bf16.msra.mxu0 0
        %1480 = vmatprep.subr.bf16.mxu0 0
        %1481 = vmatpush1.bf16.msra.mxu0 0
        %1482 = vmatprep.subr.bf16.mxu0 0
        %1483 = vmatpush1.bf16.msra.mxu0 0
        %1484 = vmatprep.subr.bf16.mxu0 0
        %1485 = vmatpush1.bf16.msra.mxu0 0
        %1486 = vmatprep.subr.bf16.mxu0 0
        %1487 = vmatpush1.bf16.msra.mxu0 0
        %1488 = vmatprep.subr.bf16.mxu0 0
        %1489 = vmatpush1.bf16.msra.mxu0 0
        %1490 = vmatprep.subr.bf16.mxu0 0
        %1491 = vmatpush1.bf16.msra.mxu0 0
        %1492 = vmatprep.subr.bf16.mxu0 0
        %1493 = vmatpush1.bf16.msra.mxu0 0
        %1494 = vmatprep.subr.bf16.mxu0 0
        %1495 = vmatpush1.bf16.msra.mxu0 0
        %1496 = vmatprep.subr.bf16.mxu0 0
        %1497 = vmatpush1.bf16.msra.mxu0 0
        %1498 = vmatprep.subr.bf16.mxu0 0
        %1499 = vmatpush1.bf16.msra.mxu0 0
        %1500 = vmatprep.subr.bf16.mxu0 0
        %1501 = vmatpush1.bf16.msra.mxu0 0
        %1502 = vmatprep.subr.bf16.mxu0 0
        %1503 = vmatpush1.bf16.msra.mxu0 0
        %1504 = vmatprep.mubr.bf16.mxu0 0
        %1505 = vmatmul.mubr.bf16.gmra.mrb[0].mxu0 %v1467
        %v1506 = vpop.f32.mrb[0].mxu0
        %v1507 = vadd.f32 0.0, %v1506
        %v1508 = vpop.f32.mrb[0].mxu0
        %v1509 = vpop.f32.mrb[0].mxu0
        %v1510 = vpop.f32.mrb[0].mxu0
        %1511 = vdwg.mxu0
        %v1512 = vpack.c.bf16 %v1507, %v1507
        %1513 = vrot.lane.b32.xlu0 %v1298, 112
        %v1514 = vpop.permute.xlu0 %1513
        %1515 = vrot.lane.b32.xlu0 %v1299, 112
        %v1516 = vpop.permute.xlu0 %1515
        %v1518 = vsel %vm1061, %v1512, 0
        %v1521 = vsel %vm1061, %v1514, 0
        %v1524 = vsel %vm1061, %v1516, 0
        %1526 = vmatprep.subr.bf16.mxu0 0
        %1527 = vmatpush1.bf16.xpose.msra.mxu0 %v1521
        %1528 = vmatprep.subr.bf16.mxu0 0
        %1529 = vmatpush1.bf16.xpose.msra.mxu0 %v1524
        %1530 = vmatprep.subr.bf16.mxu0 0
        %1531 = vmatpush1.bf16.xpose.msra.mxu0 0
        %1532 = vmatprep.subr.bf16.mxu0 0
        %1533 = vmatpush1.bf16.xpose.msra.mxu0 0
        %1534 = vmatprep.subr.bf16.mxu0 0
        %1535 = vmatpush1.bf16.xpose.msra.mxu0 0
        %1536 = vmatprep.subr.bf16.mxu0 0
        %1537 = vmatpush1.bf16.xpose.msra.mxu0 0
        %1538 = vmatprep.subr.bf16.mxu0 0
        %1539 = vmatpush1.bf16.xpose.msra.mxu0 0
        %1540 = vmatprep.subr.bf16.mxu0 0
        %1541 = vmatpush1.bf16.xpose.msra.mxu0 0
        %1542 = vmatprep.subr.bf16.mxu0 0
        %1543 = vmatpush1.bf16.xpose.msra.mxu0 0
        %1544 = vmatprep.subr.bf16.mxu0 0
        %1545 = vmatpush1.bf16.xpose.msra.mxu0 0
        %1546 = vmatprep.subr.bf16.mxu0 0
        %1547 = vmatpush1.bf16.xpose.msra.mxu0 0
        %1548 = vmatprep.subr.bf16.mxu0 0
        %1549 = vmatpush1.bf16.xpose.msra.mxu0 0
        %1550 = vmatprep.subr.bf16.mxu0 0
        %1551 = vmatpush1.bf16.xpose.msra.mxu0 0
        %1552 = vmatprep.subr.bf16.mxu0 0
        %1553 = vmatpush1.bf16.xpose.msra.mxu0 0
        %1554 = vmatprep.subr.bf16.mxu0 0
        %1555 = vmatpush1.bf16.xpose.msra.mxu0 0
        %1556 = vmatprep.subr.bf16.mxu0 0
        %1557 = vmatpush1.bf16.xpose.msra.mxu0 0
        %1558 = vmatprep.mubr.bf16.mxu0 0
        %1559 = vmatmul.mubr.bf16.gmra.mrb[0].mxu0 %v1518
        %v1560 = vpop.f32.mrb[0].mxu0
        %v1561 = vadd.f32 0.0, %v1560
        %v1562 = vpop.f32.mrb[0].mxu0
        %v1563 = vpop.f32.mrb[0].mxu0
        %v1564 = vpop.f32.mrb[0].mxu0
        %1565 = vdwg.mxu0
        %v1566 = vadd.f32 %v1397, %v1561
        %1567 = vrot.lane.b32.xlu0 %v1058, 104
        %v1568 = vpop.permute.xlu0 %1567
        %1569 = vrot.lane.b32.xlu0 %v1177, 104
        %v1570 = vpop.permute.xlu0 %1569
        %v1572 = vsel %vm1061, %v1568, 0
        %v1575 = vsel %vm1061, %v1570, 0
        %1577 = vmatprep.subr.bf16.mxu0 0
        %1578 = vmatpush1.bf16.xpose.msra.mxu0 %v1575
        %1579 = vmatprep.subr.bf16.mxu0 0
        %1580 = vmatpush1.bf16.xpose.msra.mxu0 0
        %1581 = vmatprep.subr.bf16.mxu0 0
        %1582 = vmatpush1.bf16.xpose.msra.mxu0 0
        %1583 = vmatprep.subr.bf16.mxu0 0
        %1584 = vmatpush1.bf16.xpose.msra.mxu0 0
        %1585 = vmatprep.subr.bf16.mxu0 0
        %1586 = vmatpush1.bf16.xpose.msra.mxu0 0
        %1587 = vmatprep.subr.bf16.mxu0 0
        %1588 = vmatpush1.bf16.xpose.msra.mxu0 0
        %1589 = vmatprep.subr.bf16.mxu0 0
        %1590 = vmatpush1.bf16.xpose.msra.mxu0 0
        %1591 = vmatprep.subr.bf16.mxu0 0
        %1592 = vmatpush1.bf16.xpose.msra.mxu0 0
        %1593 = vmatprep.subr.bf16.mxu0 0
        %1594 = vmatpush1.bf16.xpose.msra.mxu0 0
        %1595 = vmatprep.subr.bf16.mxu0 0
        %1596 = vmatpush1.bf16.xpose.msra.mxu0 0
        %1597 = vmatprep.subr.bf16.mxu0 0
        %1598 = vmatpush1.bf16.xpose.msra.mxu0 0
        %1599 = vmatprep.subr.bf16.mxu0 0
        %1600 = vmatpush1.bf16.xpose.msra.mxu0 0
        %1601 = vmatprep.subr.bf16.mxu0 0
        %1602 = vmatpush1.bf16.xpose.msra.mxu0 0
        %1603 = vmatprep.subr.bf16.mxu0 0
        %1604 = vmatpush1.bf16.xpose.msra.mxu0 0
        %1605 = vmatprep.subr.bf16.mxu0 0
        %1606 = vmatpush1.bf16.xpose.msra.mxu0 0
        %1607 = vmatprep.subr.bf16.mxu0 0
        %1608 = vmatpush1.bf16.xpose.msra.mxu0 0
        %1609 = vmatprep.mubr.bf16.mxu0 0
        %1610 = vmatmul.mubr.bf16.gmra.mrb[0].mxu0 %v1572
        %v1611 = vpop.f32.mrb[0].mxu0
        %v1612 = vadd.f32 0.0, %v1611
        %v1613 = vpop.f32.mrb[0].mxu0
        %v1614 = vpop.f32.mrb[0].mxu0
        %v1615 = vpop.f32.mrb[0].mxu0
        %1616 = vdwg.mxu0
        %v1617 = vsel %vm1061, %v1612, -inf
        %1618 = vmax.xlane.f32.xlu0 %v1617
        %v1619 = vpop.xlane.xlu0 %1618
        %v1620 = vsub.f32 %v1612, %v1619
        %v1621 = vmul.f32 %v1620, 1.442695
        %v1622 = vpow.pop %v1621
        %v1623 = vsel %vm1061, %v1622, 0.0
        %1624 = vadd.xlane.f32.xlu0 %v1623
        %v1625 = vpop.xlane.xlu0 %1624
        %v1626 = vrcp.pop %v1625
        %v1627 = vmul.f32 %v1622, %v1626
        %v1628 = vpack.c.bf16 %v1627, %v1627
        %1629 = vrot.lane.b32.xlu0 %v1240, 104
        %v1630 = vpop.permute.xlu0 %1629
        %v1632 = vsel %vm1061, %v1628, 0
        %v1635 = vsel %vm1123, %v1630, 0
        %1637 = vmatprep.subr.bf16.mxu0 0
        %1638 = vmatpush1.bf16.msra.mxu0 %v1635
        %1639 = vmatprep.subr.bf16.mxu0 0
        %1640 = vmatpush1.bf16.msra.mxu0 0
        %1641 = vmatprep.subr.bf16.mxu0 0
        %1642 = vmatpush1.bf16.msra.mxu0 0
        %1643 = vmatprep.subr.bf16.mxu0 0
        %1644 = vmatpush1.bf16.msra.mxu0 0
        %1645 = vmatprep.subr.bf16.mxu0 0
        %1646 = vmatpush1.bf16.msra.mxu0 0
        %1647 = vmatprep.subr.bf16.mxu0 0
        %1648 = vmatpush1.bf16.msra.mxu0 0
        %1649 = vmatprep.subr.bf16.mxu0 0
        %1650 = vmatpush1.bf16.msra.mxu0 0
        %1651 = vmatprep.subr.bf16.mxu0 0
        %1652 = vmatpush1.bf16.msra.mxu0 0
        %1653 = vmatprep.subr.bf16.mxu0 0
        %1654 = vmatpush1.bf16.msra.mxu0 0
        %1655 = vmatprep.subr.bf16.mxu0 0
        %1656 = vmatpush1.bf16.msra.mxu0 0
        %1657 = vmatprep.subr.bf16.mxu0 0
        %1658 = vmatpush1.bf16.msra.mxu0 0
        %1659 = vmatprep.subr.bf16.mxu0 0
        %1660 = vmatpush1.bf16.msra.mxu0 0
        %1661 = vmatprep.subr.bf16.mxu0 0
        %1662 = vmatpush1.bf16.msra.mxu0 0
        %1663 = vmatprep.subr.bf16.mxu0 0
        %1664 = vmatpush1.bf16.msra.mxu0 0
        %1665 = vmatprep.subr.bf16.mxu0 0
        %1666 = vmatpush1.bf16.msra.mxu0 0
        %1667 = vmatprep.subr.bf16.mxu0 0
        %1668 = vmatpush1.bf16.msra.mxu0 0
        %1669 = vmatprep.mubr.bf16.mxu0 0
        %1670 = vmatmul.mubr.bf16.gmra.mrb[0].mxu0 %v1632
        %v1671 = vpop.f32.mrb[0].mxu0
        %v1672 = vadd.f32 0.0, %v1671
        %v1673 = vpop.f32.mrb[0].mxu0
        %v1674 = vpop.f32.mrb[0].mxu0
        %v1675 = vpop.f32.mrb[0].mxu0
        %1676 = vdwg.mxu0
        %v1677 = vpack.c.bf16 %v1672, %v1672
        %1678 = vrot.lane.b32.xlu0 %v1298, 104
        %v1679 = vpop.permute.xlu0 %1678
        %1680 = vrot.lane.b32.xlu0 %v1299, 104
        %v1681 = vpop.permute.xlu0 %1680
        %v1683 = vsel %vm1061, %v1677, 0
        %v1686 = vsel %vm1061, %v1679, 0
        %v1689 = vsel %vm1061, %v1681, 0
        %1691 = vmatprep.subr.bf16.mxu0 0
        %1692 = vmatpush1.bf16.xpose.msra.mxu0 %v1686
        %1693 = vmatprep.subr.bf16.mxu0 0
        %1694 = vmatpush1.bf16.xpose.msra.mxu0 %v1689
        %1695 = vmatprep.subr.bf16.mxu0 0
        %1696 = vmatpush1.bf16.xpose.msra.mxu0 0
        %1697 = vmatprep.subr.bf16.mxu0 0
        %1698 = vmatpush1.bf16.xpose.msra.mxu0 0
        %1699 = vmatprep.subr.bf16.mxu0 0
        %1700 = vmatpush1.bf16.xpose.msra.mxu0 0
        %1701 = vmatprep.subr.bf16.mxu0 0
        %1702 = vmatpush1.bf16.xpose.msra.mxu0 0
        %1703 = vmatprep.subr.bf16.mxu0 0
        %1704 = vmatpush1.bf16.xpose.msra.mxu0 0
        %1705 = vmatprep.subr.bf16.mxu0 0
        %1706 = vmatpush1.bf16.xpose.msra.mxu0 0
        %1707 = vmatprep.subr.bf16.mxu0 0
        %1708 = vmatpush1.bf16.xpose.msra.mxu0 0
        %1709 = vmatprep.subr.bf16.mxu0 0
        %1710 = vmatpush1.bf16.xpose.msra.mxu0 0
        %1711 = vmatprep.subr.bf16.mxu0 0
        %1712 = vmatpush1.bf16.xpose.msra.mxu0 0
        %1713 = vmatprep.subr.bf16.mxu0 0
        %1714 = vmatpush1.bf16.xpose.msra.mxu0 0
        %1715 = vmatprep.subr.bf16.mxu0 0
        %1716 = vmatpush1.bf16.xpose.msra.mxu0 0
        %1717 = vmatprep.subr.bf16.mxu0 0
        %1718 = vmatpush1.bf16.xpose.msra.mxu0 0
        %1719 = vmatprep.subr.bf16.mxu0 0
        %1720 = vmatpush1.bf16.xpose.msra.mxu0 0
        %1721 = vmatprep.subr.bf16.mxu0 0
        %1722 = vmatpush1.bf16.xpose.msra.mxu0 0
        %1723 = vmatprep.mubr.bf16.mxu0 0
        %1724 = vmatmul.mubr.bf16.gmra.mrb[0].mxu0 %v1683
        %v1725 = vpop.f32.mrb[0].mxu0
        %v1726 = vadd.f32 0.0, %v1725
        %v1727 = vpop.f32.mrb[0].mxu0
        %v1728 = vpop.f32.mrb[0].mxu0
        %v1729 = vpop.f32.mrb[0].mxu0
        %1730 = vdwg.mxu0
        %v1731 = vadd.f32 %v1566, %v1726
        %v1732 = vadd.f32 %v969, %v1731
        %v1733 = vsel %vm941, %v1732, 0.0
        %1734 = vadd.xlane.f32.xlu0 %v1733
        %v1735 = vpop.xlane.xlu0 %1734
        %v1736 = vmul.f32 %v1735, %v945
        %v1737 = vsub.f32 %v1732, %v1736
        %v1738 = vmul.f32 %v1737, %v1737
        %v1739 = vsel %vm941, %v1738, 0.0
        %1740 = vadd.xlane.f32.xlu0 %v1739
        %v1741 = vpop.xlane.xlu0 %1740
        %v1742 = vmul.f32 %v1741, %v945
        %v1743 = vadd.f32 %v1742, 1e-05
        %v1744 = vrsqrt.pop %v1743
        %v1745 = vmul.f32 %v1737, %v1744
        %v1747 = vlaneseq
        %v1748 = vshrl.u32 %v1747, 7
        %v1749 = vsub.s32 0, %v1748
        %v1750 = vrot.slane %v783, %v1749
        %v1752 = vmul.f32 %v1745, %v1750
        %v1754 = vlaneseq
        %v1755 = vshrl.u32 %v1754, 7
        %v1756 = vsub.s32 0, %v1755
        %v1757 = vrot.slane %v784, %v1756
        %v1759 = vadd.f32 %v1752, %v1757
        %v1760 = vpack.c.bf16 %v1759, %v1759
        %v1761 = vld [vmem:[#allocation15] sm:$0xf]
        %v1762 = vld [vmem:[#allocation15 + $0x4] sm:$0xf]
        %v1763 = vld [vmem:[#allocation15 + $0x8] sm:$0xf]
        %v1764 = vld [vmem:[#allocation15 + $0xc] sm:$0xf]
        %v1765 = vld [vmem:[#allocation16] sm:$0x1]
        %v1767 = vlaneseq
        %v1768 = vshrl.u32 %v1767, 7
        %v1769 = vsub.s32 0, %v1768
        %v1770 = vrot.slane %v1765, %v1769
        %v1776 = vunpack.c.l.b16 %v1761
        %v1777 = vunpack.c.l.b16 %v1762
        %v1778 = vunpack.c.l.b16 %v1763
        %v1779 = vunpack.c.l.b16 %v1764
        %v1780 = vpack.c.b16 %v1777, %v1776
        %v1781 = vpack.c.b16 %v1779, %v1778
        %v1785 = vsel %vm941, %v1760, 0
        %1787 = vmatprep.subr.bf16.mxu0 0
        %1788 = vmatpush1.bf16.msra.mxu0 %v1780
        %1789 = vmatprep.subr.bf16.mxu0 0
        %1790 = vmatpush1.bf16.msra.mxu0 %v1781
        %1791 = vmatprep.subr.bf16.mxu0 0
        %1792 = vmatpush1.bf16.msra.mxu0 0
        %1793 = vmatprep.subr.bf16.mxu0 0
        %1794 = vmatpush1.bf16.msra.mxu0 0
        %1795 = vmatprep.subr.bf16.mxu0 0
        %1796 = vmatpush1.bf16.msra.mxu0 0
        %1797 = vmatprep.subr.bf16.mxu0 0
        %1798 = vmatpush1.bf16.msra.mxu0 0
        %1799 = vmatprep.subr.bf16.mxu0 0
        %1800 = vmatpush1.bf16.msra.mxu0 0
        %1801 = vmatprep.subr.bf16.mxu0 0
        %1802 = vmatpush1.bf16.msra.mxu0 0
        %1803 = vmatprep.subr.bf16.mxu0 0
        %1804 = vmatpush1.bf16.msra.mxu0 0
        %1805 = vmatprep.subr.bf16.mxu0 0
        %1806 = vmatpush1.bf16.msra.mxu0 0
        %1807 = vmatprep.subr.bf16.mxu0 0
        %1808 = vmatpush1.bf16.msra.mxu0 0
        %1809 = vmatprep.subr.bf16.mxu0 0
        %1810 = vmatpush1.bf16.msra.mxu0 0
        %1811 = vmatprep.subr.bf16.mxu0 0
        %1812 = vmatpush1.bf16.msra.mxu0 0
        %1813 = vmatprep.subr.bf16.mxu0 0
        %1814 = vmatpush1.bf16.msra.mxu0 0
        %1815 = vmatprep.subr.bf16.mxu0 0
        %1816 = vmatpush1.bf16.msra.mxu0 0
        %1817 = vmatprep.subr.bf16.mxu0 0
        %1818 = vmatpush1.bf16.msra.mxu0 0
        %1819 = vmatprep.mubr.bf16.mxu0 0
        %1820 = vmatmul.mubr.bf16.gmra.mrb[0].mxu0 %v1785
        %v1821 = vpop.f32.mrb[0].mxu0
        %v1822 = vadd.f32 %v1770, %v1821
        %v1823 = vpop.f32.mrb[0].mxu0
        %v1824 = vpop.f32.mrb[0].mxu0
        %v1825 = vpop.f32.mrb[0].mxu0
        %1826 = vdwg.mxu0
        %v1827 = vmax.f32 %v1822, 0.0
        %v1828 = vpack.c.bf16 %v1827, %v1827
        %v1829 = vld [vmem:[#allocation18] sm:$0xf]
        %v1830 = vld [vmem:[#allocation18 + $0x4] sm:$0xf]
        %v1831 = vld [vmem:[#allocation18 + $0x8] sm:$0xf]
        %v1832 = vld [vmem:[#allocation18 + $0xc] sm:$0xf]
        %v1833 = vld [vmem:[#allocation18 + $0x10] sm:$0xf]
        %v1834 = vld [vmem:[#allocation18 + $0x14] sm:$0xf]
        %v1835 = vld [vmem:[#allocation18 + $0x18] sm:$0xf]
        %v1836 = vld [vmem:[#allocation18 + $0x1c] sm:$0xf]
        %v1837 = vld [vmem:[#allocation18 + $0x20] sm:$0xf]
        %v1838 = vld [vmem:[#allocation18 + $0x24] sm:$0xf]
        %v1839 = vld [vmem:[#allocation18 + $0x28] sm:$0xf]
        %v1840 = vld [vmem:[#allocation18 + $0x2c] sm:$0xf]
        %v1841 = vld [vmem:[#allocation18 + $0x30] sm:$0xf]
        %v1842 = vld [vmem:[#allocation18 + $0x34] sm:$0xf]
        %v1843 = vld [vmem:[#allocation18 + $0x38] sm:$0xf]
        %v1844 = vld [vmem:[#allocation18 + $0x3c] sm:$0xf]
        %v1845 = vld [vmem:[#allocation19] sm:$0x1]
        %v1847 = vlaneseq
        %v1848 = vshrl.u32 %v1847, 7
        %v1849 = vsub.s32 0, %v1848
        %v1850 = vrot.slane %v1845, %v1849
        %v1868 = vunpack.c.l.b16 %v1829
        %v1869 = vunpack.c.l.b16 %v1830
        %v1870 = vunpack.c.l.b16 %v1831
        %v1871 = vunpack.c.l.b16 %v1832
        %v1872 = vunpack.c.l.b16 %v1833
        %v1873 = vunpack.c.l.b16 %v1834
        %v1874 = vunpack.c.l.b16 %v1835
        %v1875 = vunpack.c.l.b16 %v1836
        %v1876 = vunpack.c.l.b16 %v1837
        %v1877 = vunpack.c.l.b16 %v1838
        %v1878 = vunpack.c.l.b16 %v1839
        %v1879 = vunpack.c.l.b16 %v1840
        %v1880 = vunpack.c.l.b16 %v1841
        %v1881 = vunpack.c.l.b16 %v1842
        %v1882 = vunpack.c.l.b16 %v1843
        %v1883 = vunpack.c.l.b16 %v1844
        %v1884 = vpack.c.b16 %v1869, %v1868
        %v1885 = vpack.c.b16 %v1871, %v1870
        %v1886 = vpack.c.b16 %v1873, %v1872
        %v1887 = vpack.c.b16 %v1875, %v1874
        %v1888 = vpack.c.b16 %v1877, %v1876
        %v1889 = vpack.c.b16 %v1879, %v1878
        %v1890 = vpack.c.b16 %v1881, %v1880
        %v1891 = vpack.c.b16 %v1883, %v1882
        %1900 = vmatprep.subr.bf16.mxu0 0
        %1901 = vmatpush1.bf16.msra.mxu0 %v1884
        %1902 = vmatprep.subr.bf16.mxu0 0
        %1903 = vmatpush1.bf16.msra.mxu0 %v1885
        %1904 = vmatprep.subr.bf16.mxu0 0
        %1905 = vmatpush1.bf16.msra.mxu0 %v1886
        %1906 = vmatprep.subr.bf16.mxu0 0
        %1907 = vmatpush1.bf16.msra.mxu0 %v1887
        %1908 = vmatprep.subr.bf16.mxu0 0
        %1909 = vmatpush1.bf16.msra.mxu0 %v1888
        %1910 = vmatprep.subr.bf16.mxu0 0
        %1911 = vmatpush1.bf16.msra.mxu0 %v1889
        %1912 = vmatprep.subr.bf16.mxu0 0
        %1913 = vmatpush1.bf16.msra.mxu0 %v1890
        %1914 = vmatprep.subr.bf16.mxu0 0
        %1915 = vmatpush1.bf16.msra.mxu0 %v1891
        %1916 = vmatprep.subr.bf16.mxu0 0
        %1917 = vmatpush1.bf16.msra.mxu0 0
        %1918 = vmatprep.subr.bf16.mxu0 0
        %1919 = vmatpush1.bf16.msra.mxu0 0
        %1920 = vmatprep.subr.bf16.mxu0 0
        %1921 = vmatpush1.bf16.msra.mxu0 0
        %1922 = vmatprep.subr.bf16.mxu0 0
        %1923 = vmatpush1.bf16.msra.mxu0 0
        %1924 = vmatprep.subr.bf16.mxu0 0
        %1925 = vmatpush1.bf16.msra.mxu0 0
        %1926 = vmatprep.subr.bf16.mxu0 0
        %1927 = vmatpush1.bf16.msra.mxu0 0
        %1928 = vmatprep.subr.bf16.mxu0 0
        %1929 = vmatpush1.bf16.msra.mxu0 0
        %1930 = vmatprep.subr.bf16.mxu0 0
        %1931 = vmatpush1.bf16.msra.mxu0 0
        %1932 = vmatprep.mubr.bf16.mxu0 0
        %1933 = vmatmul.mubr.bf16.gmra.mrb[0].mxu0 %v1828
        %v1934 = vpop.f32.mrb[0].mxu0
        %v1935 = vadd.f32 %v1850, %v1934
        %v1936 = vpop.f32.mrb[0].mxu0
        %v1937 = vpop.f32.mrb[0].mxu0
        %v1938 = vpop.f32.mrb[0].mxu0
        %1939 = vdwg.mxu0
        %v1940 = vadd.f32 %v1732, %v1935
        %1941 = vst.msk [vmem:[%s777] sm:$0xff] %vm941, %v1940
        %s1942 = sand.u32 %s413, 1
        %s1943 = scalar_lea.sflag [#allocation6], %s1942
        %s1944 = sand.u32 %s413, 1
        %s1945 = smul.addr %s1944, 8
        %s1946 = scalar_lea.vmem [#allocation30], %s1945
        // Predicated region
        $region153: #{tpu_custom_call.1} parent=83 // pred_check
          %p1947 = pneg %p423
        $region154: #{tpu_custom_call.1} parent=83 // pred_check_branch
          %1949 = sbr.rel (%p1947) target = $region156
        $region155: #{tpu_custom_call.1} parent=83 // pred_region
          %s1951 = ssub.s32 128, 128
          %1952 = vsyncadd %s1943, %s1951
          %s1953 = sadd.s32 %s48, %s47
          %s1954 = smul.addr %s1953, 128
          %s1955 = scalar_lea.hbm %s16, %s1954
          %s1957 = sshll.u32 %s1946, 4
          %s1958 = int_to_ptr.vmem [resolvable:$true] %s1957
          %1960 = dma.vmem_to_hbm [thread:$0]  %s1958, 128, %s1955, %s1943
        $region156: #{tpu_custom_call.1} parent=83 // pred_fallthru
          _
      $region84: #{tpu_custom_call.1} parent=5 // pred_fallthru
        _
      %p1961 = scmp.le.s32.totalorder 2, %s38
      // Predicated region
      $region157: #{tpu_custom_call.1} parent=5 // pred_check
        %p1962 = pneg %p1961
      $region158: #{tpu_custom_call.1} parent=5 // pred_check_branch
        %1964 = sbr.rel (%p1962) target = $region160
      $region159: #{tpu_custom_call.1} parent=5 // pred_region
        %s1965 = ssub.s32 %s38, 2
        // Predicated region
        $region161: #{tpu_custom_call.1} parent=159 // pred_check
          %p1966 = pneg %p429
        $region162: #{tpu_custom_call.1} parent=159 // pred_check_branch
          %1968 = sbr.rel (%p1966) target = $region164
        $region163: #{tpu_custom_call.1} parent=159 // pred_region
          %s1969 = sand.u32 %s414, 1
          %s1970 = scalar_lea.sflag [#allocation6], %s1969
          %s1971 = sand.u32 %s414, 1
          %s1972 = smul.addr %s1971, 8
          %s1973 = scalar_lea.vmem [#allocation30], %s1972
          %1974 = dma.done %s1970, 128
        $region164: #{tpu_custom_call.1} parent=159 // pred_fallthru
          _
      $region160: #{tpu_custom_call.1} parent=5 // pred_fallthru
        _
    $region6: #{tpu_custom_call.1} parent=1 // loop_footer
      %s42 = sadd.s32 1, %s38
    $region7: #{tpu_custom_call.1} parent=1 // loop_footer_branch
      %37 = sbr.rel target = $region3
    $region8: #{tpu_custom_call.1} parent=1 // loop_exit
      _
    %1975 = vsyncpa [#allocation5], 1
    %s1976 = scalar_lea.sflag [#allocation5], 1
    %1977 = vsyncpa %s1976, 1
    %1978 = vsyncpa [#allocation8], 1
    %s1979 = scalar_lea.sflag [#allocation8], 1
    %1980 = vsyncpa %s1979, 1
    %1981 = vsyncpa [#allocation11], 1
    %1982 = vsyncpa [#allocation14], 1
    %1983 = vsyncpa [#allocation17], 1
    %1984 = vsyncpa [#allocation20], 1
    %1985 = vsyncpa [#allocation23], 1
    %1986 = vsyncpa [#allocation26], 1
    %1987 = vsyncpa [#allocation29], 1
    %1988 = vsyncpa [#allocation6], 1
    %s1989 = scalar_lea.sflag [#allocation6], 1
    %1990 = vsyncpa %s1989, 1

</llo_original>
